<compile_context>
chip_gen: v6e
topology: v6e:2x2x1
jax: 0.10.0
libtpu: 0.0.40
codegen_flags: <defaults>
</compile_context>

<pallas_src>
import functools
import math

import jax
import jax.numpy as jnp
from jax import lax
from jax.experimental import pallas as pl
from jax.experimental.pallas import tpu as pltpu


def _attention_kernel(x_ref, wq_ref, wqr_ref, wk_ref, wkr_ref, wv_ref,
                      wo_ref, cos_ref, sin_ref, o_ref, *,
                      n_heads, head_dim, masked, matmul_dtype, approx_recip):
    """One grid step = one batch element: (T, D) tokens -> (T, P) output."""
    f32 = jnp.float32
    md = matmul_dtype

    def mm(a, b):                       # a @ b, f32 MXU accumulation
        return lax.dot_general(a, b, (((1,), (0,)), ((), ())),
                               preferred_element_type=f32)

    def mm_t(a, b):                     # a @ b.T without materializing transpose
        return lax.dot_general(a, b, (((1,), (1,)), ((), ())),
                               preferred_element_type=f32)

    x = x_ref[...]                      # (T, D), already in matmul dtype
    cos = cos_ref[...]                  # (T, D) f32
    sin = sin_ref[...]

    # QKV projections on the MXU.  1/sqrt(head_dim) is folded into Wq / Wq@R,
    # rotate-half is folded into the Wq@R / Wk@R weights.
    q = mm(x, wq_ref[...])              # (T, D) f32
    qr = mm(x, wqr_ref[...])
    k = mm(x, wk_ref[...])
    kr = mm(x, wkr_ref[...])
    v = mm(x, wv_ref[...])

    # RoPE combine in f32 (VPU), then a single cast back to matmul dtype.
    q_m = (cos * q + sin * qr).astype(md)
    k_m = (cos * k + sin * kr).astype(md)
    v_m = v.astype(md)

    T = x.shape[0]
    if masked:
        # In-kernel causal mask (no (T,T) HBM input).  Every query row keeps at
        # least its diagonal key, so the -1e30 additive bias never produces a
        # fully-masked softmax row.
        row = lax.broadcasted_iota(jnp.int32, (T, T), 0)
        col = lax.broadcasted_iota(jnp.int32, (T, T), 1)
        neg_bias = jnp.where(col <= row, 0.0, -1e30).astype(f32)

    acc = jnp.zeros(o_ref.shape, f32)   # (T, P) accumulator over heads
    # Static unroll over heads: n_heads is small and head_dim (< 128 lanes)
    # cannot be a legal BlockSpec lane block at these sizes, so heads are not
    # made a grid axis.  Temporaries here are per-batch (T, T) only.
    for h in range(n_heads):
        sl = slice(h * head_dim, (h + 1) * head_dim)
        s = mm_t(q_m[:, sl], k_m[:, sl])                      # (T, T) f32
        if masked:
            s = s + neg_bias
        m = jnp.max(s, axis=-1, keepdims=True)
        p = jnp.exp(s - m)                                    # f32 EUP
        denom = jnp.sum(p, axis=-1, keepdims=True)
        if approx_recip:
            w = p * pl.reciprocal(denom, approx=True)
        else:
            w = p / denom
        ctx = mm(w.astype(md), v_m[:, sl])                    # (T, head_dim)
        acc = acc + mm(ctx.astype(md), wo_ref[sl, :])         # (T, P)
    o_ref[...] = acc                                          # lane-dense store


def _rotate_half_weights(w, n_heads, head_dim):
    """Return w @ R where R is the per-head rotate-half map (exact permutation)."""
    half = head_dim // 2
    blocks = []
    for h in range(n_heads):
        b = h * head_dim
        lhs = w[:, b:b + half]
        rhs = w[:, b + half:b + head_dim]
        blocks.append(jnp.concatenate([-rhs, lhs], axis=1))
    return jnp.concatenate(blocks, axis=1)


def self_attention_pallas(x, wq, wk, wv, wo, rope_cos, rope_sin, *,
                          n_heads, masked, matmul_dtype=jnp.bfloat16,
                          approx_recip=None):
    """x: (B, T, D). Weights are (D, D), stored so y = x @ W (== torch x @ W.T)."""
    B, T, D = x.shape
    head_dim = D // n_heads
    P = max(128, pl.cdiv(D, 128) * 128)     # lane-dense padded output width
    f32 = jnp.float32
    md = matmul_dtype
    if approx_recip is None:
        approx_recip = (md != jnp.float32)  # exact divide on the f32 check path
    inv_sqrt_hd = 1.0 / math.sqrt(head_dim)

    # Wrapper-side weight / layout plumbing (plain XLA, outside the kernel).
    # All matmul operands are shipped to the kernel already in matmul dtype.
    wq_s = (wq * inv_sqrt_hd).astype(md)
    wqr_s = (_rotate_half_weights(wq, n_heads, head_dim) * inv_sqrt_hd).astype(md)
    wk_m = wk.astype(md)
    wkr_m = _rotate_half_weights(wk, n_heads, head_dim).astype(md)
    wv_m = wv.astype(md)
    wo_pad = jnp.zeros((D, P), md).at[:, :D].set(wo.astype(md))

    # cos/sin tiled per head (lanes) only -> (T, D); no batch tiling.
    cos_td = jnp.tile(rope_cos[:T].astype(f32), (1, n_heads))
    sin_td = jnp.tile(rope_sin[:T].astype(f32), (1, n_heads))

    x_m = x.astype(md)                   # (B, T, D)

    kernel = functools.partial(
        _attention_kernel, n_heads=n_heads, head_dim=head_dim, masked=masked,
        matmul_dtype=md, approx_recip=approx_recip)

    def const(shape):                    # constant-index (weight / rope) blocks
        return pl.BlockSpec(shape, lambda b: (0,) * len(shape))

    out_pad = pl.pallas_call(
        kernel,
        out_shape=jax.ShapeDtypeStruct((B, T, P), f32),
        grid_spec=pltpu.PrefetchScalarGridSpec(
            num_scalar_prefetch=0,
            grid=(B,),                                  # one step per batch element
            in_specs=[
                pl.BlockSpec((None, T, D), lambda b: (b, 0, 0)),   # x  (per batch)
                const((D, D)),                                     # Wq (scaled)
                const((D, D)),                                     # Wq @ R (scaled)
                const((D, D)),                                     # Wk
                const((D, D)),                                     # Wk @ R
                const((D, D)),                                     # Wv
                const((D, P)),                                     # Wo (lane-padded)
                const((T, D)),                                     # cos
                const((T, D)),                                     # sin
            ],
            out_specs=pl.BlockSpec((None, T, P), lambda b: (b, 0, 0)),
        ),
        compiler_params=pltpu.CompilerParams(
            # Batch axis is independent -> shards across both TCs on v7x.
            dimension_semantics=("parallel",)),
    )(x_m, wq_s, wqr_s, wk_m, wkr_m, wv_m, wo_pad, cos_td, sin_td)

    return out_pad[:, :, :D]


def compute_rope_angles(head_dim, theta_base, context_length):
    # mirrors SelfAttention.compute_rope_angles
    freqs = theta_base ** (-2.0 * (jnp.arange(0, head_dim // 2, dtype=jnp.float32)
                                   / head_dim))
    positions = jnp.arange(context_length, dtype=jnp.float32)[:, None]
    angles = positions * freqs[None, :]
    angles = jnp.concatenate([angles, angles], axis=1)      # (ctx, head_dim)
    return jnp.cos(angles), jnp.sin(angles)


def reference_self_attention(x, wq, wk, wv, wo, cos, sin, *, n_heads, masked):
    # Pure-JAX float32 reference, faithful to the torch module's forward().
    B, T, D = x.shape
    hd = D // n_heads

    def rope(t):  # t: (B, H, T, hd)
        lhs, rhs = t[..., :hd // 2], t[..., hd // 2:]
        rot = jnp.concatenate([-rhs, lhs], axis=-1)
        return cos[None, None] * t + rot * sin[None, None]

    def split(y):
        return y.reshape(B, T, n_heads, hd).transpose(0, 2, 1, 3)

    q = rope(split(x @ wq))
    k = rope(split(x @ wk))
    v = split(x @ wv)
    s = jnp.einsum("bhqd,bhkd->bhqk", q, k) / math.sqrt(hd)
    if masked:
        causal = jnp.triu(jnp.ones((T, T), dtype=bool), k=1)
        s = jnp.where(causal[None, None], -jnp.inf, s)
    w = jax.nn.softmax(s, axis=-1)
    ctx = jnp.einsum("bhqk,bhkd->bhqd", w, v).transpose(0, 2, 1, 3).reshape(B, T, D)
    return ctx @ wo


if __name__ == "__main__":
    B = 2
    CONTEXT_LENGTH = 8          # == sequence length here
    EMB_DIM = 32
    N_HEADS = 4
    HEAD_DIM = EMB_DIM // N_HEADS
    MASKED = True
    THETA_BASE = 10000.0

    key = jax.random.PRNGKey(0)
    kx, kq, kk, kv, ko = jax.random.split(key, 5)

    x = jax.random.normal(kx, (B, CONTEXT_LENGTH, EMB_DIM), dtype=jnp.float32)
    # nn.Linear(emb_dim, emb_dim, bias=False) weights, stored pre-transposed so
    # that y = x @ W_kernel.
    scale = 1.0 / math.sqrt(EMB_DIM)
    wq = jax.random.normal(kq, (EMB_DIM, EMB_DIM), dtype=jnp.float32) * scale
    wk = jax.random.normal(kk, (EMB_DIM, EMB_DIM), dtype=jnp.float32) * scale
    wv = jax.random.normal(kv, (EMB_DIM, EMB_DIM), dtype=jnp.float32) * scale
    wo = jax.random.normal(ko, (EMB_DIM, EMB_DIM), dtype=jnp.float32) * scale

    rope_cos, rope_sin = compute_rope_angles(HEAD_DIM, THETA_BASE, CONTEXT_LENGTH)

    ref = reference_self_attention(x, wq, wk, wv, wo, rope_cos, rope_sin,
                                   n_heads=N_HEADS, masked=MASKED)

    # f32-operand path: structural check of the kernel math (exact softmax divide).
    out_f32 = jax.block_until_ready(
        self_attention_pallas(x, wq, wk, wv, wo, rope_cos, rope_sin,
                              n_heads=N_HEADS, masked=MASKED,
                              matmul_dtype=jnp.float32))
    err_f32 = float(jnp.max(jnp.abs(out_f32 - ref)))

    # bf16-operand path (MXU-friendly, f32 accumulation): production setting.
    out_bf16 = jax.block_until_ready(
        self_attention_pallas(x, wq, wk, wv, wo, rope_cos, rope_sin,
                              n_heads=N_HEADS, masked=MASKED,
                              matmul_dtype=jnp.bfloat16))
    err_bf16 = float(jnp.max(jnp.abs(out_bf16 - ref)))

    assert out_f32.shape == (B, CONTEXT_LENGTH, EMB_DIM)
    assert out_bf16.shape == (B, CONTEXT_LENGTH, EMB_DIM)
    # Tolerances: TPU f32 matmul precision for the check path; bf16 operand
    # rounding (f32 accumulation) + approx reciprocal for the production path.
    assert jnp.allclose(out_f32, ref, atol=1e-2, rtol=1e-2), (
        f"f32-path mismatch vs reference (max abs err {err_f32:.3e})")
    assert jnp.allclose(out_bf16, ref, atol=1e-1, rtol=1e-1), (
        f"bf16-path mismatch vs reference (max abs err {err_bf16:.3e})")

    print("KERNEL_OK")
</pallas_src>

<mosaic_0001>
module attributes {stable_mosaic.version = 11 : i64} {
  func.func @_attention_kernel(%arg0: i32, %arg1: memref<1x8x32xf32, #tpu.memory_space<vmem>>, %arg2: memref<32x32xf32, #tpu.memory_space<vmem>>, %arg3: memref<32x32xf32, #tpu.memory_space<vmem>>, %arg4: memref<32x32xf32, #tpu.memory_space<vmem>>, %arg5: memref<32x32xf32, #tpu.memory_space<vmem>>, %arg6: memref<32x32xf32, #tpu.memory_space<vmem>>, %arg7: memref<32x128xf32, #tpu.memory_space<vmem>>, %arg8: memref<8x32xf32, #tpu.memory_space<vmem>>, %arg9: memref<8x32xf32, #tpu.memory_space<vmem>>, %arg10: memref<1x8x128xf32, #tpu.memory_space<vmem>>) attributes {dimension_semantics = [#tpu.dimension_semantics<parallel>], iteration_bounds = array<i64: 2>, scalar_prefetch = 0 : i64, scratch_operands = 0 : i64, tpu.core_type = #tpu.core_type<tc>, window_params = [{transform_indices = @transform_0, window_bounds = array<i64: 1, 8, 32>}, {pipeline_mode = #tpu.pipeline_mode<synchronous>, transform_indices = @transform_1, window_bounds = array<i64: 32, 32>}, {pipeline_mode = #tpu.pipeline_mode<synchronous>, transform_indices = @transform_2, window_bounds = array<i64: 32, 32>}, {pipeline_mode = #tpu.pipeline_mode<synchronous>, transform_indices = @transform_3, window_bounds = array<i64: 32, 32>}, {pipeline_mode = #tpu.pipeline_mode<synchronous>, transform_indices = @transform_4, window_bounds = array<i64: 32, 32>}, {pipeline_mode = #tpu.pipeline_mode<synchronous>, transform_indices = @transform_5, window_bounds = array<i64: 32, 32>}, {pipeline_mode = #tpu.pipeline_mode<synchronous>, transform_indices = @transform_6, window_bounds = array<i64: 32, 128>}, {pipeline_mode = #tpu.pipeline_mode<synchronous>, transform_indices = @transform_7, window_bounds = array<i64: 8, 32>}, {pipeline_mode = #tpu.pipeline_mode<synchronous>, transform_indices = @transform_8, window_bounds = array<i64: 8, 32>}, {transform_indices = @transform_9, window_bounds = array<i64: 1, 8, 128>}]} {
    %c0 = arith.constant 0 : index
    %c0_0 = arith.constant 0 : index
    %c0_1 = arith.constant 0 : index
    %0 = vector.load %arg1[%c0, %c0_0, %c0_1] : memref<1x8x32xf32, #tpu.memory_space<vmem>>, vector<1x8x32xf32>
    %1 = vector.shape_cast %0 : vector<1x8x32xf32> to vector<8x32xf32>
    %c0_2 = arith.constant 0 : index
    %c0_3 = arith.constant 0 : index
    %2 = vector.load %arg8[%c0_2, %c0_3] : memref<8x32xf32, #tpu.memory_space<vmem>>, vector<8x32xf32>
    %c0_4 = arith.constant 0 : index
    %c0_5 = arith.constant 0 : index
    %3 = vector.load %arg9[%c0_4, %c0_5] : memref<8x32xf32, #tpu.memory_space<vmem>>, vector<8x32xf32>
    %c0_6 = arith.constant 0 : index
    %c0_7 = arith.constant 0 : index
    %4 = vector.load %arg2[%c0_6, %c0_7] : memref<32x32xf32, #tpu.memory_space<vmem>>, vector<32x32xf32>
    %cst = arith.constant dense<0.000000e+00> : vector<8x32xf32>
    %5 = tpu.matmul %1, %4, %cst {dimension_numbers = #tpu.dot_dimension_numbers<[1], [0], [0], [1], [0, 0, 1, 1], [], []>} : vector<8x32xf32>, vector<32x32xf32>, vector<8x32xf32> -> vector<8x32xf32>
    %c0_8 = arith.constant 0 : index
    %c0_9 = arith.constant 0 : index
    %6 = vector.load %arg3[%c0_8, %c0_9] : memref<32x32xf32, #tpu.memory_space<vmem>>, vector<32x32xf32>
    %cst_10 = arith.constant dense<0.000000e+00> : vector<8x32xf32>
    %7 = tpu.matmul %1, %6, %cst_10 {dimension_numbers = #tpu.dot_dimension_numbers<[1], [0], [0], [1], [0, 0, 1, 1], [], []>} : vector<8x32xf32>, vector<32x32xf32>, vector<8x32xf32> -> vector<8x32xf32>
    %c0_11 = arith.constant 0 : index
    %c0_12 = arith.constant 0 : index
    %8 = vector.load %arg4[%c0_11, %c0_12] : memref<32x32xf32, #tpu.memory_space<vmem>>, vector<32x32xf32>
    %cst_13 = arith.constant dense<0.000000e+00> : vector<8x32xf32>
    %9 = tpu.matmul %1, %8, %cst_13 {dimension_numbers = #tpu.dot_dimension_numbers<[1], [0], [0], [1], [0, 0, 1, 1], [], []>} : vector<8x32xf32>, vector<32x32xf32>, vector<8x32xf32> -> vector<8x32xf32>
    %c0_14 = arith.constant 0 : index
    %c0_15 = arith.constant 0 : index
    %10 = vector.load %arg5[%c0_14, %c0_15] : memref<32x32xf32, #tpu.memory_space<vmem>>, vector<32x32xf32>
    %cst_16 = arith.constant dense<0.000000e+00> : vector<8x32xf32>
    %11 = tpu.matmul %1, %10, %cst_16 {dimension_numbers = #tpu.dot_dimension_numbers<[1], [0], [0], [1], [0, 0, 1, 1], [], []>} : vector<8x32xf32>, vector<32x32xf32>, vector<8x32xf32> -> vector<8x32xf32>
    %c0_17 = arith.constant 0 : index
    %c0_18 = arith.constant 0 : index
    %12 = vector.load %arg6[%c0_17, %c0_18] : memref<32x32xf32, #tpu.memory_space<vmem>>, vector<32x32xf32>
    %cst_19 = arith.constant dense<0.000000e+00> : vector<8x32xf32>
    %13 = tpu.matmul %1, %12, %cst_19 {dimension_numbers = #tpu.dot_dimension_numbers<[1], [0], [0], [1], [0, 0, 1, 1], [], []>} : vector<8x32xf32>, vector<32x32xf32>, vector<8x32xf32> -> vector<8x32xf32>
    %14 = arith.mulf %2, %5 : vector<8x32xf32>
    %15 = arith.mulf %3, %7 : vector<8x32xf32>
    %16 = arith.addf %14, %15 : vector<8x32xf32>
    %17 = arith.mulf %2, %9 : vector<8x32xf32>
    %18 = arith.mulf %3, %11 : vector<8x32xf32>
    %19 = arith.addf %17, %18 : vector<8x32xf32>
    %20 = tpu.iota {dimensions = array<i32: 0>} : vector<8x8xi32>
    %21 = tpu.iota {dimensions = array<i32: 1>} : vector<8x8xi32>
    %22 = arith.cmpi sle, %21, %20 : vector<8x8xi32>
    %cst_20 = arith.constant 0.000000e+00 : f32
    %cst_21 = arith.constant -1.000000e+30 : f32
    %23 = vector.broadcast %cst_20 : f32 to vector<8x8xf32>
    %24 = vector.broadcast %cst_21 : f32 to vector<8x8xf32>
    %25 = arith.select %22, %23, %24 : vector<8x8xi1>, vector<8x8xf32>
    %cst_22 = arith.constant 0.000000e+00 : f32
    %26 = vector.broadcast %cst_22 : f32 to vector<8x128xf32>
    %27 = vector.extract_strided_slice %16 {offsets = [0, 0], sizes = [8, 8], strides = [1, 1]} : vector<8x32xf32> to vector<8x8xf32>
    %28 = vector.extract_strided_slice %19 {offsets = [0, 0], sizes = [8, 8], strides = [1, 1]} : vector<8x32xf32> to vector<8x8xf32>
    %cst_23 = arith.constant dense<0.000000e+00> : vector<8x8xf32>
    %29 = tpu.matmul %27, %28, %cst_23 {dimension_numbers = #tpu.dot_dimension_numbers<[1], [1], [0], [0], [0, 0, 1, 0], [], []>} : vector<8x8xf32>, vector<8x8xf32>, vector<8x8xf32> -> vector<8x8xf32>
    %30 = arith.addf %29, %25 : vector<8x8xf32>
    %cst_24 = arith.constant dense<0xFF800000> : vector<8xf32>
    %31 = vector.multi_reduction <maximumf>, %30, %cst_24 [1] : vector<8x8xf32> to vector<8xf32>
    %32 = vector.shape_cast %31 : vector<8xf32> to vector<8x1xf32>
    %33 = vector.broadcast %32 : vector<8x1xf32> to vector<8x8xf32>
    %34 = arith.subf %30, %33 : vector<8x8xf32>
    %35 = math.exp %34 : vector<8x8xf32>
    %cst_25 = arith.constant dense<0.000000e+00> : vector<8xf32>
    %36 = vector.multi_reduction <add>, %35, %cst_25 [1] : vector<8x8xf32> to vector<8xf32>
    %37 = vector.shape_cast %36 : vector<8xf32> to vector<8x1xf32>
    %38 = vector.broadcast %37 : vector<8x1xf32> to vector<8x8xf32>
    %39 = arith.divf %35, %38 : vector<8x8xf32>
    %40 = vector.extract_strided_slice %13 {offsets = [0, 0], sizes = [8, 8], strides = [1, 1]} : vector<8x32xf32> to vector<8x8xf32>
    %cst_26 = arith.constant dense<0.000000e+00> : vector<8x8xf32>
    %41 = tpu.matmul %39, %40, %cst_26 {dimension_numbers = #tpu.dot_dimension_numbers<[1], [0], [0], [1], [0, 0, 1, 1], [], []>} : vector<8x8xf32>, vector<8x8xf32>, vector<8x8xf32> -> vector<8x8xf32>
    %c0_27 = arith.constant 0 : index
    %c0_28 = arith.constant 0 : index
    %42 = vector.load %arg7[%c0_27, %c0_28] : memref<32x128xf32, #tpu.memory_space<vmem>>, vector<8x128xf32>
    %cst_29 = arith.constant dense<0.000000e+00> : vector<8x128xf32>
    %43 = tpu.matmul %41, %42, %cst_29 {dimension_numbers = #tpu.dot_dimension_numbers<[1], [0], [0], [1], [0, 0, 1, 1], [], []>} : vector<8x8xf32>, vector<8x128xf32>, vector<8x128xf32> -> vector<8x128xf32>
    %44 = arith.addf %26, %43 : vector<8x128xf32>
    %45 = vector.extract_strided_slice %16 {offsets = [0, 8], sizes = [8, 8], strides = [1, 1]} : vector<8x32xf32> to vector<8x8xf32>
    %46 = vector.extract_strided_slice %19 {offsets = [0, 8], sizes = [8, 8], strides = [1, 1]} : vector<8x32xf32> to vector<8x8xf32>
    %cst_30 = arith.constant dense<0.000000e+00> : vector<8x8xf32>
    %47 = tpu.matmul %45, %46, %cst_30 {dimension_numbers = #tpu.dot_dimension_numbers<[1], [1], [0], [0], [0, 0, 1, 0], [], []>} : vector<8x8xf32>, vector<8x8xf32>, vector<8x8xf32> -> vector<8x8xf32>
    %48 = arith.addf %47, %25 : vector<8x8xf32>
    %cst_31 = arith.constant dense<0xFF800000> : vector<8xf32>
    %49 = vector.multi_reduction <maximumf>, %48, %cst_31 [1] : vector<8x8xf32> to vector<8xf32>
    %50 = vector.shape_cast %49 : vector<8xf32> to vector<8x1xf32>
    %51 = vector.broadcast %50 : vector<8x1xf32> to vector<8x8xf32>
    %52 = arith.subf %48, %51 : vector<8x8xf32>
    %53 = math.exp %52 : vector<8x8xf32>
    %cst_32 = arith.constant dense<0.000000e+00> : vector<8xf32>
    %54 = vector.multi_reduction <add>, %53, %cst_32 [1] : vector<8x8xf32> to vector<8xf32>
    %55 = vector.shape_cast %54 : vector<8xf32> to vector<8x1xf32>
    %56 = vector.broadcast %55 : vector<8x1xf32> to vector<8x8xf32>
    %57 = arith.divf %53, %56 : vector<8x8xf32>
    %58 = vector.extract_strided_slice %13 {offsets = [0, 8], sizes = [8, 8], strides = [1, 1]} : vector<8x32xf32> to vector<8x8xf32>
    %cst_33 = arith.constant dense<0.000000e+00> : vector<8x8xf32>
    %59 = tpu.matmul %57, %58, %cst_33 {dimension_numbers = #tpu.dot_dimension_numbers<[1], [0], [0], [1], [0, 0, 1, 1], [], []>} : vector<8x8xf32>, vector<8x8xf32>, vector<8x8xf32> -> vector<8x8xf32>
    %c8 = arith.constant 8 : index
    %c0_34 = arith.constant 0 : index
    %60 = vector.load %arg7[%c8, %c0_34] : memref<32x128xf32, #tpu.memory_space<vmem>>, vector<8x128xf32>
    %cst_35 = arith.constant dense<0.000000e+00> : vector<8x128xf32>
    %61 = tpu.matmul %59, %60, %cst_35 {dimension_numbers = #tpu.dot_dimension_numbers<[1], [0], [0], [1], [0, 0, 1, 1], [], []>} : vector<8x8xf32>, vector<8x128xf32>, vector<8x128xf32> -> vector<8x128xf32>
    %62 = arith.addf %44, %61 : vector<8x128xf32>
    %63 = vector.extract_strided_slice %16 {offsets = [0, 16], sizes = [8, 8], strides = [1, 1]} : vector<8x32xf32> to vector<8x8xf32>
    %64 = vector.extract_strided_slice %19 {offsets = [0, 16], sizes = [8, 8], strides = [1, 1]} : vector<8x32xf32> to vector<8x8xf32>
    %cst_36 = arith.constant dense<0.000000e+00> : vector<8x8xf32>
    %65 = tpu.matmul %63, %64, %cst_36 {dimension_numbers = #tpu.dot_dimension_numbers<[1], [1], [0], [0], [0, 0, 1, 0], [], []>} : vector<8x8xf32>, vector<8x8xf32>, vector<8x8xf32> -> vector<8x8xf32>
    %66 = arith.addf %65, %25 : vector<8x8xf32>
    %cst_37 = arith.constant dense<0xFF800000> : vector<8xf32>
    %67 = vector.multi_reduction <maximumf>, %66, %cst_37 [1] : vector<8x8xf32> to vector<8xf32>
    %68 = vector.shape_cast %67 : vector<8xf32> to vector<8x1xf32>
    %69 = vector.broadcast %68 : vector<8x1xf32> to vector<8x8xf32>
    %70 = arith.subf %66, %69 : vector<8x8xf32>
    %71 = math.exp %70 : vector<8x8xf32>
    %cst_38 = arith.constant dense<0.000000e+00> : vector<8xf32>
    %72 = vector.multi_reduction <add>, %71, %cst_38 [1] : vector<8x8xf32> to vector<8xf32>
    %73 = vector.shape_cast %72 : vector<8xf32> to vector<8x1xf32>
    %74 = vector.broadcast %73 : vector<8x1xf32> to vector<8x8xf32>
    %75 = arith.divf %71, %74 : vector<8x8xf32>
    %76 = vector.extract_strided_slice %13 {offsets = [0, 16], sizes = [8, 8], strides = [1, 1]} : vector<8x32xf32> to vector<8x8xf32>
    %cst_39 = arith.constant dense<0.000000e+00> : vector<8x8xf32>
    %77 = tpu.matmul %75, %76, %cst_39 {dimension_numbers = #tpu.dot_dimension_numbers<[1], [0], [0], [1], [0, 0, 1, 1], [], []>} : vector<8x8xf32>, vector<8x8xf32>, vector<8x8xf32> -> vector<8x8xf32>
    %c16 = arith.constant 16 : index
    %c0_40 = arith.constant 0 : index
    %78 = vector.load %arg7[%c16, %c0_40] : memref<32x128xf32, #tpu.memory_space<vmem>>, vector<8x128xf32>
    %cst_41 = arith.constant dense<0.000000e+00> : vector<8x128xf32>
    %79 = tpu.matmul %77, %78, %cst_41 {dimension_numbers = #tpu.dot_dimension_numbers<[1], [0], [0], [1], [0, 0, 1, 1], [], []>} : vector<8x8xf32>, vector<8x128xf32>, vector<8x128xf32> -> vector<8x128xf32>
    %80 = arith.addf %62, %79 : vector<8x128xf32>
    %81 = vector.extract_strided_slice %16 {offsets = [0, 24], sizes = [8, 8], strides = [1, 1]} : vector<8x32xf32> to vector<8x8xf32>
    %82 = vector.extract_strided_slice %19 {offsets = [0, 24], sizes = [8, 8], strides = [1, 1]} : vector<8x32xf32> to vector<8x8xf32>
    %cst_42 = arith.constant dense<0.000000e+00> : vector<8x8xf32>
    %83 = tpu.matmul %81, %82, %cst_42 {dimension_numbers = #tpu.dot_dimension_numbers<[1], [1], [0], [0], [0, 0, 1, 0], [], []>} : vector<8x8xf32>, vector<8x8xf32>, vector<8x8xf32> -> vector<8x8xf32>
    %84 = arith.addf %83, %25 : vector<8x8xf32>
    %cst_43 = arith.constant dense<0xFF800000> : vector<8xf32>
    %85 = vector.multi_reduction <maximumf>, %84, %cst_43 [1] : vector<8x8xf32> to vector<8xf32>
    %86 = vector.shape_cast %85 : vector<8xf32> to vector<8x1xf32>
    %87 = vector.broadcast %86 : vector<8x1xf32> to vector<8x8xf32>
    %88 = arith.subf %84, %87 : vector<8x8xf32>
    %89 = math.exp %88 : vector<8x8xf32>
    %cst_44 = arith.constant dense<0.000000e+00> : vector<8xf32>
    %90 = vector.multi_reduction <add>, %89, %cst_44 [1] : vector<8x8xf32> to vector<8xf32>
    %91 = vector.shape_cast %90 : vector<8xf32> to vector<8x1xf32>
    %92 = vector.broadcast %91 : vector<8x1xf32> to vector<8x8xf32>
    %93 = arith.divf %89, %92 : vector<8x8xf32>
    %94 = vector.extract_strided_slice %13 {offsets = [0, 24], sizes = [8, 8], strides = [1, 1]} : vector<8x32xf32> to vector<8x8xf32>
    %cst_45 = arith.constant dense<0.000000e+00> : vector<8x8xf32>
    %95 = tpu.matmul %93, %94, %cst_45 {dimension_numbers = #tpu.dot_dimension_numbers<[1], [0], [0], [1], [0, 0, 1, 1], [], []>} : vector<8x8xf32>, vector<8x8xf32>, vector<8x8xf32> -> vector<8x8xf32>
    %c24 = arith.constant 24 : index
    %c0_46 = arith.constant 0 : index
    %96 = vector.load %arg7[%c24, %c0_46] : memref<32x128xf32, #tpu.memory_space<vmem>>, vector<8x128xf32>
    %cst_47 = arith.constant dense<0.000000e+00> : vector<8x128xf32>
    %97 = tpu.matmul %95, %96, %cst_47 {dimension_numbers = #tpu.dot_dimension_numbers<[1], [0], [0], [1], [0, 0, 1, 1], [], []>} : vector<8x8xf32>, vector<8x128xf32>, vector<8x128xf32> -> vector<8x128xf32>
    %98 = arith.addf %80, %97 : vector<8x128xf32>
    %c0_48 = arith.constant 0 : index
    %c0_49 = arith.constant 0 : index
    %c0_50 = arith.constant 0 : index
    %99 = vector.load %arg10[%c0_48, %c0_49, %c0_50] : memref<1x8x128xf32, #tpu.memory_space<vmem>>, vector<1x8x128xf32>
    %100 = vector.shape_cast %99 : vector<1x8x128xf32> to vector<8x128xf32>
    %101 = vector.shape_cast %98 : vector<8x128xf32> to vector<1x8x128xf32>
    tpu.vector_store %arg10[%c0_48, %c0_49, %c0_50], %101 {strides = array<i32>} : memref<1x8x128xf32, #tpu.memory_space<vmem>>, vector<1x8x128xf32>,
    return
  }
  func.func @transform_0(%arg0: i32) -> (i32, i32, i32) {
    %c0_i32 = arith.constant 0 : i32
    %c0_i32_0 = arith.constant 0 : i32
    %c0_i32_1 = arith.constant 0 : i32
    return %arg0, %c0_i32, %c0_i32_0 : i32, i32, i32
  }
  func.func @transform_1(%arg0: i32) -> (i32, i32) {
    %c0_i32 = arith.constant 0 : i32
    %c0_i32_0 = arith.constant 0 : i32
    %c0_i32_1 = arith.constant 0 : i32
    return %c0_i32, %c0_i32_0 : i32, i32
  }
  func.func @transform_2(%arg0: i32) -> (i32, i32) {
    %c0_i32 = arith.constant 0 : i32
    %c0_i32_0 = arith.constant 0 : i32
    %c0_i32_1 = arith.constant 0 : i32
    return %c0_i32, %c0_i32_0 : i32, i32
  }
  func.func @transform_3(%arg0: i32) -> (i32, i32) {
    %c0_i32 = arith.constant 0 : i32
    %c0_i32_0 = arith.constant 0 : i32
    %c0_i32_1 = arith.constant 0 : i32
    return %c0_i32, %c0_i32_0 : i32, i32
  }
  func.func @transform_4(%arg0: i32) -> (i32, i32) {
    %c0_i32 = arith.constant 0 : i32
    %c0_i32_0 = arith.constant 0 : i32
    %c0_i32_1 = arith.constant 0 : i32
    return %c0_i32, %c0_i32_0 : i32, i32
  }
  func.func @transform_5(%arg0: i32) -> (i32, i32) {
    %c0_i32 = arith.constant 0 : i32
    %c0_i32_0 = arith.constant 0 : i32
    %c0_i32_1 = arith.constant 0 : i32
    return %c0_i32, %c0_i32_0 : i32, i32
  }
  func.func @transform_6(%arg0: i32) -> (i32, i32) {
    %c0_i32 = arith.constant 0 : i32
    %c0_i32_0 = arith.constant 0 : i32
    %c0_i32_1 = arith.constant 0 : i32
    return %c0_i32, %c0_i32_0 : i32, i32
  }
  func.func @transform_7(%arg0: i32) -> (i32, i32) {
    %c0_i32 = arith.constant 0 : i32
    %c0_i32_0 = arith.constant 0 : i32
    %c0_i32_1 = arith.constant 0 : i32
    return %c0_i32, %c0_i32_0 : i32, i32
  }
  func.func @transform_8(%arg0: i32) -> (i32, i32) {
    %c0_i32 = arith.constant 0 : i32
    %c0_i32_0 = arith.constant 0 : i32
    %c0_i32_1 = arith.constant 0 : i32
    return %c0_i32, %c0_i32_0 : i32, i32
  }
  func.func @transform_9(%arg0: i32) -> (i32, i32, i32) {
    %c0_i32 = arith.constant 0 : i32
    %c0_i32_0 = arith.constant 0 : i32
    %c0_i32_1 = arith.constant 0 : i32
    return %arg0, %c0_i32, %c0_i32_0 : i32, i32, i32
  }
}

</mosaic_0001>

<llo_original>
// kernel: tpu_custom_call.1
$region0: #{tpu_custom_call.1}
  #allocation0 [shape = 'u32[]', space=smem, size = 0x4, offset = 0x4, fixed_abs, tag = 'smem constant byte address 0x4 - core index']
  #allocation1 [shape = 'u32[144,128]{1,0:T(1,128)}', space=vmem, size = 0x12000, scoped, tag = 'internal scratch']
  %s0 = inlined_call_operand.hbm [shape: f32[2,8,32], index: 0, kind: input, shape index: {}]
  %s1 = inlined_call_operand.hbm [shape: f32[32,32], index: 1, kind: input, shape index: {}]
  %s2 = inlined_call_operand.hbm [shape: f32[32,32], index: 2, kind: input, shape index: {}]
  %s3 = inlined_call_operand.hbm [shape: f32[32,32], index: 3, kind: input, shape index: {}]
  %s4 = inlined_call_operand.hbm [shape: f32[32,32], index: 4, kind: input, shape index: {}]
  %s5 = inlined_call_operand.hbm [shape: f32[32,32], index: 5, kind: input, shape index: {}]
  %s6 = inlined_call_operand.hbm [shape: f32[32,128], index: 6, kind: input, shape index: {}]
  %s7 = inlined_call_operand.vmem [shape: f32[8,32], index: 7, kind: input, shape index: {}]
  %s8 = inlined_call_operand.hbm [shape: f32[8,32], index: 8, kind: input, shape index: {}]
  %s9 = inlined_call_operand.hbm [shape: f32[2,8,128], index: 9, kind: output, shape index: {}]
  %s10 = sld [smem:[#allocation0]]
  $region101: #{tpu_custom_call.1} parent=0
    _
  %s12 = ssub.s32 1, %s10
  %s13 = scalar_select 0, %s12, %s10
  $region1: #{tpu_custom_call.1} parent=0
    #allocation2 [shape = 'u8[8192]{0}', space=vmem, size = 0x2000, scoped, tag = 'input window, operand 0']
    #allocation3 [shape = 's32[2]{0}', space=sflag, size = 0x8, scoped, tag = 'scoped memory for tpu_custom_call.1']
    #allocation4 [shape = 's32[2]{0}', space=sflag, size = 0x8, scoped, tag = 'scoped memory for tpu_custom_call.1']
    #allocation5 [shape = 'u8[16384]{0}', space=vmem, size = 0x4000, scoped, tag = 'input window, operand 1, single buffered']
    #allocation6 [shape = 's32[1]{0}', space=sflag, size = 0x4, scoped, tag = 'scoped memory for tpu_custom_call.1']
    #allocation7 [shape = 'u8[16384]{0}', space=vmem, size = 0x4000, scoped, tag = 'input window, operand 2, single buffered']
    #allocation8 [shape = 'u8[16384]{0}', space=vmem, size = 0x4000, scoped, tag = 'input window, operand 3, single buffered']
    #allocation9 [shape = 's32[1]{0}', space=sflag, size = 0x4, scoped, tag = 'scoped memory for tpu_custom_call.1']
    #allocation10 [shape = 'u8[16384]{0}', space=vmem, size = 0x4000, scoped, tag = 'input window, operand 4, single buffered']
    #allocation11 [shape = 'u8[16384]{0}', space=vmem, size = 0x4000, scoped, tag = 'input window, operand 5, single buffered']
    #allocation12 [shape = 's32[1]{0}', space=sflag, size = 0x4, scoped, tag = 'scoped memory for tpu_custom_call.1']
    #allocation13 [shape = 'u8[16384]{0}', space=vmem, size = 0x4000, scoped, tag = 'input window, operand 6, single buffered']
    #allocation14 [shape = 'u8[4096]{0}', space=vmem, size = 0x1000, scoped, tag = 'input window, operand 8, single buffered']
    #allocation15 [shape = 's32[1]{0}', space=sflag, size = 0x4, scoped, tag = 'scoped memory for tpu_custom_call.1']
    #allocation16 [shape = 'u8[8192]{0}', space=vmem, size = 0x2000, scoped, tag = 'output window, operand 0']
    %14 = vsyncpa [#allocation3], 0
    %s15 = scalar_lea.sflag [#allocation3], 1
    %16 = vsyncpa %s15, 0
    %17 = vsyncpa [#allocation6], 0
    %18 = vsyncpa [#allocation9], 0
    %19 = vsyncpa [#allocation12], 0
    %20 = vsyncpa [#allocation15], 0
    %21 = vsyncpa [#allocation4], 0
    %s22 = scalar_lea.sflag [#allocation4], 1
    %23 = vsyncpa %s22, 0
    loop: start=0, step=1, limit=4
    $region2: #{tpu_custom_call.1} parent=1 // loop_pre_header
      _
    $region3: #{tpu_custom_call.1} parent=1 // loop_header
      %s25 = sphi 0, %s29
      %p26 = scmp.ge.s32.totalorder %s25, 4
      %s35 = sphi 0, %s37
      %s38 = sphi 0, %s35
      %s39 = sphi 0, %s38
      %s55 = sphi 0, %s39
      %s59 = sphi 0, %s59
      %s61 = sphi 0, %s59
      %s62 = sphi 0, %s61
      %s76 = sphi 0, %s62
      %s80 = sphi 0, %s80
      %s82 = sphi 0, %s80
      %s83 = sphi 0, %s82
      %s97 = sphi 0, %s83
      %s101 = sphi 0, %s101
      %s103 = sphi 0, %s101
      %s104 = sphi 0, %s103
      %s118 = sphi 0, %s104
      %s122 = sphi 0, %s122
      %s124 = sphi 0, %s122
      %s125 = sphi 0, %s124
      %s139 = sphi 0, %s125
      %s143 = sphi 0, %s143
      %s145 = sphi 0, %s143
      %s146 = sphi 0, %s145
      %s160 = sphi 0, %s146
      %s164 = sphi 0, %s164
      %s166 = sphi 0, %s164
      %s167 = sphi 0, %s166
      %s181 = sphi 0, %s167
      %s185 = sphi 0, %s185
      %s187 = sphi 0, %s185
      %s188 = sphi 0, %s187
      %s202 = sphi 0, %s188
      %s206 = sphi 0, %s206
      %s208 = sphi 0, %s206
      %s209 = sphi 0, %s208
      %s223 = sphi 0, %s209
      %s229 = sphi 0, %s231
      %s232 = sphi 0, %s229
      %s233 = sphi 0, %s232
      %s249 = sphi 0, %s233
    $region4: #{tpu_custom_call.1} parent=1 // loop_header_branch
      %28 = sbr.rel (%p26) target = $region8
    $region5: #{tpu_custom_call.1} parent=1 // loop_body
      %s30 = ssub.s32 %s25, 1
      %s31 = ssub.s32 %s25, 2
      %s32 = sadd.s32 %s25, 1
      %s33 = ssub.s32 %s25, %s32
      %p34 = scmp.eq.s32.totalorder %s33, 0
      %s36 = sadd.s32 %s35, 1
      %s37 = scalar_select %p34, %s35, %s36
      %p40 = pneg %p34
      %p41 = scmp.eq.s32.totalorder %s25, 1
      %p42 = por %p40, %p41
      %p43 = scmp.ne.s32.totalorder %s35, %s38
      %p44 = scmp.eq.s32.totalorder %s25, 0
      %p45 = por %p43, %p44
      %p46 = scmp.ne.s32.totalorder %s35, %s38
      %p47 = scmp.eq.s32.totalorder %s30, 1
      %p48 = por %p46, %p47
      %p49 = scmp.ne.s32.totalorder %s38, %s39
      %p50 = scmp.eq.s32.totalorder %s30, 0
      %p51 = por %p49, %p50
      %p52 = scmp.ne.s32.totalorder %s38, %s39
      %p53 = scmp.eq.s32.totalorder %s31, 1
      %p54 = por %p52, %p53
      %p56 = scmp.ne.s32.totalorder %s39, %s55
      %p57 = scmp.eq.s32.totalorder %s31, 0
      %p58 = por %p56, %p57
      %s60 = sadd.s32 %s59, 1
      %p63 = scmp.eq.s32.totalorder %s25, 1
      %p64 = scmp.ne.s32.totalorder %s59, %s61
      %p65 = scmp.eq.s32.totalorder %s25, 0
      %p66 = por %p64, %p65
      %p67 = scmp.ne.s32.totalorder %s59, %s61
      %p68 = scmp.eq.s32.totalorder %s30, 1
      %p69 = por %p67, %p68
      %p70 = scmp.ne.s32.totalorder %s61, %s62
      %p71 = scmp.eq.s32.totalorder %s30, 0
      %p72 = por %p70, %p71
      %p73 = scmp.ne.s32.totalorder %s61, %s62
      %p74 = scmp.eq.s32.totalorder %s31, 1
      %p75 = por %p73, %p74
      %p77 = scmp.ne.s32.totalorder %s62, %s76
      %p78 = scmp.eq.s32.totalorder %s31, 0
      %p79 = por %p77, %p78
      %s81 = sadd.s32 %s80, 1
      %p84 = scmp.eq.s32.totalorder %s25, 1
      %p85 = scmp.ne.s32.totalorder %s80, %s82
      %p86 = scmp.eq.s32.totalorder %s25, 0
      %p87 = por %p85, %p86
      %p88 = scmp.ne.s32.totalorder %s80, %s82
      %p89 = scmp.eq.s32.totalorder %s30, 1
      %p90 = por %p88, %p89
      %p91 = scmp.ne.s32.totalorder %s82, %s83
      %p92 = scmp.eq.s32.totalorder %s30, 0
      %p93 = por %p91, %p92
      %p94 = scmp.ne.s32.totalorder %s82, %s83
      %p95 = scmp.eq.s32.totalorder %s31, 1
      %p96 = por %p94, %p95
      %p98 = scmp.ne.s32.totalorder %s83, %s97
      %p99 = scmp.eq.s32.totalorder %s31, 0
      %p100 = por %p98, %p99
      %s102 = sadd.s32 %s101, 1
      %p105 = scmp.eq.s32.totalorder %s25, 1
      %p106 = scmp.ne.s32.totalorder %s101, %s103
      %p107 = scmp.eq.s32.totalorder %s25, 0
      %p108 = por %p106, %p107
      %p109 = scmp.ne.s32.totalorder %s101, %s103
      %p110 = scmp.eq.s32.totalorder %s30, 1
      %p111 = por %p109, %p110
      %p112 = scmp.ne.s32.totalorder %s103, %s104
      %p113 = scmp.eq.s32.totalorder %s30, 0
      %p114 = por %p112, %p113
      %p115 = scmp.ne.s32.totalorder %s103, %s104
      %p116 = scmp.eq.s32.totalorder %s31, 1
      %p117 = por %p115, %p116
      %p119 = scmp.ne.s32.totalorder %s104, %s118
      %p120 = scmp.eq.s32.totalorder %s31, 0
      %p121 = por %p119, %p120
      %s123 = sadd.s32 %s122, 1
      %p126 = scmp.eq.s32.totalorder %s25, 1
      %p127 = scmp.ne.s32.totalorder %s122, %s124
      %p128 = scmp.eq.s32.totalorder %s25, 0
      %p129 = por %p127, %p128
      %p130 = scmp.ne.s32.totalorder %s122, %s124
      %p131 = scmp.eq.s32.totalorder %s30, 1
      %p132 = por %p130, %p131
      %p133 = scmp.ne.s32.totalorder %s124, %s125
      %p134 = scmp.eq.s32.totalorder %s30, 0
      %p135 = por %p133, %p134
      %p136 = scmp.ne.s32.totalorder %s124, %s125
      %p137 = scmp.eq.s32.totalorder %s31, 1
      %p138 = por %p136, %p137
      %p140 = scmp.ne.s32.totalorder %s125, %s139
      %p141 = scmp.eq.s32.totalorder %s31, 0
      %p142 = por %p140, %p141
      %s144 = sadd.s32 %s143, 1
      %p147 = scmp.eq.s32.totalorder %s25, 1
      %p148 = scmp.ne.s32.totalorder %s143, %s145
      %p149 = scmp.eq.s32.totalorder %s25, 0
      %p150 = por %p148, %p149
      %p151 = scmp.ne.s32.totalorder %s143, %s145
      %p152 = scmp.eq.s32.totalorder %s30, 1
      %p153 = por %p151, %p152
      %p154 = scmp.ne.s32.totalorder %s145, %s146
      %p155 = scmp.eq.s32.totalorder %s30, 0
      %p156 = por %p154, %p155
      %p157 = scmp.ne.s32.totalorder %s145, %s146
      %p158 = scmp.eq.s32.totalorder %s31, 1
      %p159 = por %p157, %p158
      %p161 = scmp.ne.s32.totalorder %s146, %s160
      %p162 = scmp.eq.s32.totalorder %s31, 0
      %p163 = por %p161, %p162
      %s165 = sadd.s32 %s164, 1
      %p168 = scmp.eq.s32.totalorder %s25, 1
      %p169 = scmp.ne.s32.totalorder %s164, %s166
      %p170 = scmp.eq.s32.totalorder %s25, 0
      %p171 = por %p169, %p170
      %p172 = scmp.ne.s32.totalorder %s164, %s166
      %p173 = scmp.eq.s32.totalorder %s30, 1
      %p174 = por %p172, %p173
      %p175 = scmp.ne.s32.totalorder %s166, %s167
      %p176 = scmp.eq.s32.totalorder %s30, 0
      %p177 = por %p175, %p176
      %p178 = scmp.ne.s32.totalorder %s166, %s167
      %p179 = scmp.eq.s32.totalorder %s31, 1
      %p180 = por %p178, %p179
      %p182 = scmp.ne.s32.totalorder %s167, %s181
      %p183 = scmp.eq.s32.totalorder %s31, 0
      %p184 = por %p182, %p183
      %s186 = sadd.s32 %s185, 1
      %p189 = scmp.eq.s32.totalorder %s25, 1
      %p190 = scmp.ne.s32.totalorder %s185, %s187
      %p191 = scmp.eq.s32.totalorder %s25, 0
      %p192 = por %p190, %p191
      %p193 = scmp.ne.s32.totalorder %s185, %s187
      %p194 = scmp.eq.s32.totalorder %s30, 1
      %p195 = por %p193, %p194
      %p196 = scmp.ne.s32.totalorder %s187, %s188
      %p197 = scmp.eq.s32.totalorder %s30, 0
      %p198 = por %p196, %p197
      %p199 = scmp.ne.s32.totalorder %s187, %s188
      %p200 = scmp.eq.s32.totalorder %s31, 1
      %p201 = por %p199, %p200
      %p203 = scmp.ne.s32.totalorder %s188, %s202
      %p204 = scmp.eq.s32.totalorder %s31, 0
      %p205 = por %p203, %p204
      %s207 = sadd.s32 %s206, 1
      %p210 = scmp.eq.s32.totalorder %s25, 1
      %p211 = scmp.ne.s32.totalorder %s206, %s208
      %p212 = scmp.eq.s32.totalorder %s25, 0
      %p213 = por %p211, %p212
      %p214 = scmp.ne.s32.totalorder %s206, %s208
      %p215 = scmp.eq.s32.totalorder %s30, 1
      %p216 = por %p214, %p215
      %p217 = scmp.ne.s32.totalorder %s208, %s209
      %p218 = scmp.eq.s32.totalorder %s30, 0
      %p219 = por %p217, %p218
      %p220 = scmp.ne.s32.totalorder %s208, %s209
      %p221 = scmp.eq.s32.totalorder %s31, 1
      %p222 = por %p220, %p221
      %p224 = scmp.ne.s32.totalorder %s209, %s223
      %p225 = scmp.eq.s32.totalorder %s31, 0
      %p226 = por %p224, %p225
      %s227 = ssub.s32 %s25, %s32
      %p228 = scmp.eq.s32.totalorder %s227, 0
      %s230 = sadd.s32 %s229, 1
      %s231 = scalar_select %p228, %s229, %s230
      %p234 = pneg %p228
      %p235 = scmp.eq.s32.totalorder %s25, 1
      %p236 = por %p234, %p235
      %p237 = scmp.ne.s32.totalorder %s229, %s232
      %p238 = scmp.eq.s32.totalorder %s25, 0
      %p239 = por %p237, %p238
      %p240 = scmp.ne.s32.totalorder %s229, %s232
      %p241 = scmp.eq.s32.totalorder %s30, 1
      %p242 = por %p240, %p241
      %p243 = scmp.ne.s32.totalorder %s232, %s233
      %p244 = scmp.eq.s32.totalorder %s30, 0
      %p245 = por %p243, %p244
      %p246 = scmp.ne.s32.totalorder %s232, %s233
      %p247 = scmp.eq.s32.totalorder %s31, 1
      %p248 = por %p246, %p247
      %p250 = scmp.ne.s32.totalorder %s233, %s249
      %p251 = scmp.eq.s32.totalorder %s31, 0
      %p252 = por %p250, %p251
      %p253 = scmp.le.s32.totalorder 1, %s25
      %p254 = scmp.lt.s32.totalorder %s25, 3
      %p255 = pnand %p253, %p254
      %p256 = pneg %p255
      // Predicated region
      $region9: #{tpu_custom_call.1} parent=5 // pred_check
        _
      $region10: #{tpu_custom_call.1} parent=5 // pred_check_branch
        %258 = sbr.rel (%p255) target = $region12
      $region11: #{tpu_custom_call.1} parent=5 // pred_region
        %s259 = ssub.s32 %s25, 1
        // Predicated region
        $region13: #{tpu_custom_call.1} parent=11 // pred_check
          %p260 = pneg %p72
        $region14: #{tpu_custom_call.1} parent=11 // pred_check_branch
          %262 = sbr.rel (%p260) target = $region16
        $region15: #{tpu_custom_call.1} parent=11 // pred_region
          %s264 = ssub.s32 512, 512
          %265 = vsyncadd [#allocation6], %s264
          %s266 = sshll.u32 [#allocation5], 4
          %s267 = int_to_ptr.vmem [resolvable:$true] %s266
          %272 = dma.hbm_to_vmem [thread:$0]  %s1, 512, %s267, [#allocation6], 128, 128, 8
        $region16: #{tpu_custom_call.1} parent=11 // pred_fallthru
          _
        // Predicated region
        $region17: #{tpu_custom_call.1} parent=11 // pred_check
          %p273 = pneg %p93
        $region18: #{tpu_custom_call.1} parent=11 // pred_check_branch
          %275 = sbr.rel (%p273) target = $region20
        $region19: #{tpu_custom_call.1} parent=11 // pred_region
          %s277 = ssub.s32 512, 512
          %278 = vsyncadd [#allocation6], %s277
          %s279 = sshll.u32 [#allocation7], 4
          %s280 = int_to_ptr.vmem [resolvable:$true] %s279
          %285 = dma.hbm_to_vmem [thread:$0]  %s2, 512, %s280, [#allocation6], 128, 128, 8
        $region20: #{tpu_custom_call.1} parent=11 // pred_fallthru
          _
        // Predicated region
        $region21: #{tpu_custom_call.1} parent=11 // pred_check
          %p286 = pneg %p114
        $region22: #{tpu_custom_call.1} parent=11 // pred_check_branch
          %288 = sbr.rel (%p286) target = $region24
        $region23: #{tpu_custom_call.1} parent=11 // pred_region
          %s290 = ssub.s32 512, 512
          %291 = vsyncadd [#allocation9], %s290
          %s292 = sshll.u32 [#allocation8], 4
          %s293 = int_to_ptr.vmem [resolvable:$true] %s292
          %298 = dma.hbm_to_vmem [thread:$0]  %s3, 512, %s293, [#allocation9], 128, 128, 8
        $region24: #{tpu_custom_call.1} parent=11 // pred_fallthru
          _
        // Predicated region
        $region25: #{tpu_custom_call.1} parent=11 // pred_check
          %p299 = pneg %p135
        $region26: #{tpu_custom_call.1} parent=11 // pred_check_branch
          %301 = sbr.rel (%p299) target = $region28
        $region27: #{tpu_custom_call.1} parent=11 // pred_region
          %s303 = ssub.s32 512, 512
          %304 = vsyncadd [#allocation9], %s303
          %s305 = sshll.u32 [#allocation10], 4
          %s306 = int_to_ptr.vmem [resolvable:$true] %s305
          %311 = dma.hbm_to_vmem [thread:$0]  %s4, 512, %s306, [#allocation9], 128, 128, 8
        $region28: #{tpu_custom_call.1} parent=11 // pred_fallthru
          _
        // Predicated region
        $region29: #{tpu_custom_call.1} parent=11 // pred_check
          %p312 = pneg %p156
        $region30: #{tpu_custom_call.1} parent=11 // pred_check_branch
          %314 = sbr.rel (%p312) target = $region32
        $region31: #{tpu_custom_call.1} parent=11 // pred_region
          %s316 = ssub.s32 512, 512
          %317 = vsyncadd [#allocation12], %s316
          %s318 = sshll.u32 [#allocation11], 4
          %s319 = int_to_ptr.vmem [resolvable:$true] %s318
          %324 = dma.hbm_to_vmem [thread:$0]  %s5, 512, %s319, [#allocation12], 128, 128, 8
        $region32: #{tpu_custom_call.1} parent=11 // pred_fallthru
          _
        // Predicated region
        $region33: #{tpu_custom_call.1} parent=11 // pred_check
          %p325 = pneg %p177
        $region34: #{tpu_custom_call.1} parent=11 // pred_check_branch
          %327 = sbr.rel (%p325) target = $region36
        $region35: #{tpu_custom_call.1} parent=11 // pred_region
          %s329 = ssub.s32 512, 512
          %330 = vsyncadd [#allocation12], %s329
          %s331 = sshll.u32 [#allocation13], 4
          %s332 = int_to_ptr.vmem [resolvable:$true] %s331
          %337 = dma.hbm_to_vmem [thread:$0]  %s6, 512, %s332, [#allocation12], 128, 128, 8
        $region36: #{tpu_custom_call.1} parent=11 // pred_fallthru
          _
        // Predicated region
        $region37: #{tpu_custom_call.1} parent=11 // pred_check
          %p338 = pneg %p198
        $region38: #{tpu_custom_call.1} parent=11 // pred_check_branch
          %340 = sbr.rel (%p338) target = $region40
        $region39: #{tpu_custom_call.1} parent=11 // pred_region
          _
        $region40: #{tpu_custom_call.1} parent=11 // pred_fallthru
          _
        // Predicated region
        $region41: #{tpu_custom_call.1} parent=11 // pred_check
          %p341 = pneg %p219
        $region42: #{tpu_custom_call.1} parent=11 // pred_check_branch
          %343 = sbr.rel (%p341) target = $region44
        $region43: #{tpu_custom_call.1} parent=11 // pred_region
          %s345 = ssub.s32 128, 128
          %346 = vsyncadd [#allocation15], %s345
          %s348 = sshll.u32 [#allocation14], 4
          %s349 = int_to_ptr.vmem [resolvable:$true] %s348
          %351 = dma.hbm_to_vmem [thread:$0]  %s8, 128, %s349, [#allocation15]
        $region44: #{tpu_custom_call.1} parent=11 // pred_fallthru
          _
      $region12: #{tpu_custom_call.1} parent=5 // pred_fallthru
        _
      %p352 = scmp.lt.s32.totalorder %s25, 2
      // Predicated region
      $region45: #{tpu_custom_call.1} parent=5 // pred_check
        %p353 = pneg %p352
      $region46: #{tpu_custom_call.1} parent=5 // pred_check_branch
        %355 = sbr.rel (%p353) target = $region48
      $region47: #{tpu_custom_call.1} parent=5 // pred_region
        // Predicated region
        $region49: #{tpu_custom_call.1} parent=47 // pred_check
          %p356 = pneg %p45
        $region50: #{tpu_custom_call.1} parent=47 // pred_check_branch
          %358 = sbr.rel (%p356) target = $region52
        $region51: #{tpu_custom_call.1} parent=47 // pred_region
          %s359 = sand.u32 %s35, 1
          %s360 = scalar_lea.sflag [#allocation3], %s359
          %s361 = sand.u32 %s35, 1
          %s362 = smul.addr %s361, 8
          %s363 = scalar_lea.vmem [#allocation2], %s362
          %s365 = ssub.s32 128, 128
          %366 = vsyncadd %s360, %s365
          %s367 = smul.addr %s25, 128
          %s368 = scalar_lea.hbm %s0, %s367
          %s370 = sshll.u32 %s363, 4
          %s371 = int_to_ptr.vmem [resolvable:$true] %s370
          %373 = dma.hbm_to_vmem [thread:$0]  %s368, 128, %s371, %s360
        $region52: #{tpu_custom_call.1} parent=47 // pred_fallthru
          _
      $region48: #{tpu_custom_call.1} parent=5 // pred_fallthru
        _
      %p374 = scmp.le.s32.totalorder 1, %s25
      %p375 = scmp.lt.s32.totalorder %s25, 3
      %p376 = pnand %p374, %p375
      %p377 = pneg %p376
      // Predicated region
      $region53: #{tpu_custom_call.1} parent=5 // pred_check
        _
      $region54: #{tpu_custom_call.1} parent=5 // pred_check_branch
        %379 = sbr.rel (%p376) target = $region56
      $region55: #{tpu_custom_call.1} parent=5 // pred_region
        %s380 = ssub.s32 %s25, 1
        %s381 = sand.u32 %s38, 1
        %s382 = scalar_lea.sflag [#allocation3], %s381
        %s383 = sand.u32 %s38, 1
        %s384 = smul.addr %s383, 8
        %s385 = scalar_lea.vmem [#allocation2], %s384
        // Predicated region
        $region57: #{tpu_custom_call.1} parent=55 // pred_check
          %p386 = pneg %p51
        $region58: #{tpu_custom_call.1} parent=55 // pred_check_branch
          %388 = sbr.rel (%p386) target = $region60
        $region59: #{tpu_custom_call.1} parent=55 // pred_region
          %389 = dma.done %s382, 128
        $region60: #{tpu_custom_call.1} parent=55 // pred_fallthru
          _
        // Predicated region
        $region61: #{tpu_custom_call.1} parent=55 // pred_check
          %p390 = pneg %p72
        $region62: #{tpu_custom_call.1} parent=55 // pred_check_branch
          %392 = sbr.rel (%p390) target = $region64
        $region63: #{tpu_custom_call.1} parent=55 // pred_region
          %393 = dma.done [#allocation6], 512
        $region64: #{tpu_custom_call.1} parent=55 // pred_fallthru
          _
        // Predicated region
        $region65: #{tpu_custom_call.1} parent=55 // pred_check
          %p394 = pneg %p93
        $region66: #{tpu_custom_call.1} parent=55 // pred_check_branch
          %396 = sbr.rel (%p394) target = $region68
        $region67: #{tpu_custom_call.1} parent=55 // pred_region
          %397 = dma.done [#allocation6], 512
        $region68: #{tpu_custom_call.1} parent=55 // pred_fallthru
          _
        // Predicated region
        $region69: #{tpu_custom_call.1} parent=55 // pred_check
          %p398 = pneg %p114
        $region70: #{tpu_custom_call.1} parent=55 // pred_check_branch
          %400 = sbr.rel (%p398) target = $region72
        $region71: #{tpu_custom_call.1} parent=55 // pred_region
          %401 = dma.done [#allocation9], 512
        $region72: #{tpu_custom_call.1} parent=55 // pred_fallthru
          _
        // Predicated region
        $region73: #{tpu_custom_call.1} parent=55 // pred_check
          %p402 = pneg %p135
        $region74: #{tpu_custom_call.1} parent=55 // pred_check_branch
          %404 = sbr.rel (%p402) target = $region76
        $region75: #{tpu_custom_call.1} parent=55 // pred_region
          %405 = dma.done [#allocation9], 512
        $region76: #{tpu_custom_call.1} parent=55 // pred_fallthru
          _
        // Predicated region
        $region77: #{tpu_custom_call.1} parent=55 // pred_check
          %p406 = pneg %p156
        $region78: #{tpu_custom_call.1} parent=55 // pred_check_branch
          %408 = sbr.rel (%p406) target = $region80
        $region79: #{tpu_custom_call.1} parent=55 // pred_region
          %409 = dma.done [#allocation12], 512
        $region80: #{tpu_custom_call.1} parent=55 // pred_fallthru
          _
        // Predicated region
        $region81: #{tpu_custom_call.1} parent=55 // pred_check
          %p410 = pneg %p177
        $region82: #{tpu_custom_call.1} parent=55 // pred_check_branch
          %412 = sbr.rel (%p410) target = $region84
        $region83: #{tpu_custom_call.1} parent=55 // pred_region
          %413 = dma.done [#allocation12], 512
        $region84: #{tpu_custom_call.1} parent=55 // pred_fallthru
          _
        // Predicated region
        $region85: #{tpu_custom_call.1} parent=55 // pred_check
          %p414 = pneg %p219
        $region86: #{tpu_custom_call.1} parent=55 // pred_check_branch
          %416 = sbr.rel (%p414) target = $region88
        $region87: #{tpu_custom_call.1} parent=55 // pred_region
          %417 = dma.done [#allocation15], 128
        $region88: #{tpu_custom_call.1} parent=55 // pred_fallthru
          _
        %s418 = sand.u32 %s38, 1
        %s419 = scalar_lea.sflag [#allocation3], %s418
        %s420 = sand.u32 %s38, 1
        %s421 = smul.addr %s420, 8
        %s422 = scalar_lea.vmem [#allocation2], %s421
        %p423 = pneg %p51
        %p424 = pneg %p48
        %p425 = pneg %p72
        %p426 = pneg %p69
        %p427 = pneg %p93
        %p428 = pneg %p90
        %p429 = pneg %p114
        %p430 = pneg %p111
        %p431 = pneg %p135
        %p432 = pneg %p132
        %p433 = pneg %p156
        %p434 = pneg %p153
        %p435 = pneg %p177
        %p436 = pneg %p174
        %p437 = pneg %p198
        %p438 = pneg %p195
        %p439 = pneg %p219
        %p440 = pneg %p216
        %p441 = pneg %p245
        %p442 = pneg %p242
        %s443 = sand.u32 %s232, 1
        %s444 = scalar_lea.sflag [#allocation4], %s443
        %s445 = sand.u32 %s232, 1
        %s446 = smul.addr %s445, 8
        %s447 = scalar_lea.vmem [#allocation16], %s446
        %v448 = vld [vmem:[%s385] sm:$0xff]
        %v449 = vld [vmem:[%s7] sm:$0xff]
        %v450 = vld [vmem:[#allocation14] sm:$0xff]
        %v451 = vld [vmem:[#allocation5] sm:$0xff]
        %v452 = vld [vmem:[#allocation5 + $0x8] sm:$0xff]
        %v453 = vld [vmem:[#allocation5 + $0x10] sm:$0xff]
        %v454 = vld [vmem:[#allocation5 + $0x18] sm:$0xff]
        %vm455 = vcmask 261120
        %v457 = vsel %vm455, %v448, 0
        %459 = vmatprep.subr.mxu0 0.0
        %460 = vmatpush1.msra.mxu0 0.0
        %461 = vmatprep.subr.mxu0 0.0
        %462 = vmatpush1.msra.mxu0 0.0
        %463 = vmatprep.subr.mxu0 0.0
        %464 = vmatpush1.msra.mxu0 0.0
        %465 = vmatprep.subr.mxu0 0.0
        %466 = vmatpush1.msra.mxu0 0.0
        %467 = vmatprep.subr.mxu0 0.0
        %468 = vmatpush1.msra.mxu0 0.0
        %469 = vmatprep.subr.mxu0 0.0
        %470 = vmatpush1.msra.mxu0 0.0
        %471 = vmatprep.subr.mxu0 0.0
        %472 = vmatpush1.msra.mxu0 0.0
        %473 = vmatprep.subr.mxu0 0.0
        %474 = vmatpush1.msra.mxu0 0.0
        %475 = vmatprep.subr.mxu0 0.0
        %476 = vmatpush1.msra.mxu0 0.0
        %477 = vmatprep.subr.mxu0 0.0
        %478 = vmatpush1.msra.mxu0 0.0
        %479 = vmatprep.subr.mxu0 0.0
        %480 = vmatpush1.msra.mxu0 0.0
        %481 = vmatprep.subr.mxu0 0.0
        %482 = vmatpush1.msra.mxu0 0.0
        %483 = vmatprep.subr.mxu0 0.0
        %484 = vmatpush1.msra.mxu0 %v454
        %485 = vmatprep.subr.mxu0 0.0
        %486 = vmatpush1.msra.mxu0 %v453
        %487 = vmatprep.subr.mxu0 0.0
        %488 = vmatpush1.msra.mxu0 %v452
        %489 = vmatprep.subr.mxu0 0.0
        %490 = vmatpush1.msra.mxu0 %v451
        %491 = vmatprep.subr.mxu0 0.0
        %492 = vmatpush2.msra.mxu0 0.0
        %493 = vmatprep.subr.mxu0 0.0
        %494 = vmatpush2.msra.mxu0 0.0
        %495 = vmatprep.subr.mxu0 0.0
        %496 = vmatpush2.msra.mxu0 0.0
        %497 = vmatprep.subr.mxu0 0.0
        %498 = vmatpush2.msra.mxu0 0.0
        %499 = vmatprep.subr.mxu0 0.0
        %500 = vmatpush2.msra.mxu0 0.0
        %501 = vmatprep.subr.mxu0 0.0
        %502 = vmatpush2.msra.mxu0 0.0
        %503 = vmatprep.subr.mxu0 0.0
        %504 = vmatpush2.msra.mxu0 0.0
        %505 = vmatprep.subr.mxu0 0.0
        %506 = vmatpush2.msra.mxu0 0.0
        %507 = vmatprep.subr.mxu0 0.0
        %508 = vmatpush2.msra.mxu0 0.0
        %509 = vmatprep.subr.mxu0 0.0
        %510 = vmatpush2.msra.mxu0 0.0
        %511 = vmatprep.subr.mxu0 0.0
        %512 = vmatpush2.msra.mxu0 0.0
        %513 = vmatprep.subr.mxu0 0.0
        %514 = vmatpush2.msra.mxu0 0.0
        %515 = vmatprep.subr.mxu0 0.0
        %516 = vmatpush2.msra.mxu0 0.0
        %517 = vmatprep.subr.mxu0 0.0
        %518 = vmatpush2.msra.mxu0 0.0
        %519 = vmatprep.subr.mxu0 0.0
        %520 = vmatpush2.msra.mxu0 0.0
        %521 = vmatprep.subr.mxu0 0.0
        %522 = vmatpush2.msra.mxu0 0.0
        %523 = vmatprep.mubr.f32.mxu0 0.0
        %524 = vmatmul.mubr.f32.gmra.mxu0 %v457
        %v525 = vpop.f32.mrf.mxu0
        %v526 = vadd.f32 0.0, %v525
        %v527 = vpop.f32.mrf.mxu0
        %528 = vdwg.mxu0
        %v529 = vld [vmem:[#allocation7] sm:$0xff]
        %v530 = vld [vmem:[#allocation7 + $0x8] sm:$0xff]
        %v531 = vld [vmem:[#allocation7 + $0x10] sm:$0xff]
        %v532 = vld [vmem:[#allocation7 + $0x18] sm:$0xff]
        %533 = vmatprep.subr.mxu0 0.0
        %534 = vmatpush1.msra.mxu0 0.0
        %535 = vmatprep.subr.mxu0 0.0
        %536 = vmatpush1.msra.mxu0 0.0
        %537 = vmatprep.subr.mxu0 0.0
        %538 = vmatpush1.msra.mxu0 0.0
        %539 = vmatprep.subr.mxu0 0.0
        %540 = vmatpush1.msra.mxu0 0.0
        %541 = vmatprep.subr.mxu0 0.0
        %542 = vmatpush1.msra.mxu0 0.0
        %543 = vmatprep.subr.mxu0 0.0
        %544 = vmatpush1.msra.mxu0 0.0
        %545 = vmatprep.subr.mxu0 0.0
        %546 = vmatpush1.msra.mxu0 0.0
        %547 = vmatprep.subr.mxu0 0.0
        %548 = vmatpush1.msra.mxu0 0.0
        %549 = vmatprep.subr.mxu0 0.0
        %550 = vmatpush1.msra.mxu0 0.0
        %551 = vmatprep.subr.mxu0 0.0
        %552 = vmatpush1.msra.mxu0 0.0
        %553 = vmatprep.subr.mxu0 0.0
        %554 = vmatpush1.msra.mxu0 0.0
        %555 = vmatprep.subr.mxu0 0.0
        %556 = vmatpush1.msra.mxu0 0.0
        %557 = vmatprep.subr.mxu0 0.0
        %558 = vmatpush1.msra.mxu0 %v532
        %559 = vmatprep.subr.mxu0 0.0
        %560 = vmatpush1.msra.mxu0 %v531
        %561 = vmatprep.subr.mxu0 0.0
        %562 = vmatpush1.msra.mxu0 %v530
        %563 = vmatprep.subr.mxu0 0.0
        %564 = vmatpush1.msra.mxu0 %v529
        %565 = vmatprep.subr.mxu0 0.0
        %566 = vmatpush2.msra.mxu0 0.0
        %567 = vmatprep.subr.mxu0 0.0
        %568 = vmatpush2.msra.mxu0 0.0
        %569 = vmatprep.subr.mxu0 0.0
        %570 = vmatpush2.msra.mxu0 0.0
        %571 = vmatprep.subr.mxu0 0.0
        %572 = vmatpush2.msra.mxu0 0.0
        %573 = vmatprep.subr.mxu0 0.0
        %574 = vmatpush2.msra.mxu0 0.0
        %575 = vmatprep.subr.mxu0 0.0
        %576 = vmatpush2.msra.mxu0 0.0
        %577 = vmatprep.subr.mxu0 0.0
        %578 = vmatpush2.msra.mxu0 0.0
        %579 = vmatprep.subr.mxu0 0.0
        %580 = vmatpush2.msra.mxu0 0.0
        %581 = vmatprep.subr.mxu0 0.0
        %582 = vmatpush2.msra.mxu0 0.0
        %583 = vmatprep.subr.mxu0 0.0
        %584 = vmatpush2.msra.mxu0 0.0
        %585 = vmatprep.subr.mxu0 0.0
        %586 = vmatpush2.msra.mxu0 0.0
        %587 = vmatprep.subr.mxu0 0.0
        %588 = vmatpush2.msra.mxu0 0.0
        %589 = vmatprep.subr.mxu0 0.0
        %590 = vmatpush2.msra.mxu0 0.0
        %591 = vmatprep.subr.mxu0 0.0
        %592 = vmatpush2.msra.mxu0 0.0
        %593 = vmatprep.subr.mxu0 0.0
        %594 = vmatpush2.msra.mxu0 0.0
        %595 = vmatprep.subr.mxu0 0.0
        %596 = vmatpush2.msra.mxu0 0.0
        %597 = vmatprep.mubr.f32.mxu0 0.0
        %598 = vmatmul.mubr.f32.gmra.mxu0 %v457
        %v599 = vpop.f32.mrf.mxu0
        %v600 = vadd.f32 0.0, %v599
        %v601 = vpop.f32.mrf.mxu0
        %602 = vdwg.mxu0
        %v603 = vld [vmem:[#allocation8] sm:$0xff]
        %v604 = vld [vmem:[#allocation8 + $0x8] sm:$0xff]
        %v605 = vld [vmem:[#allocation8 + $0x10] sm:$0xff]
        %v606 = vld [vmem:[#allocation8 + $0x18] sm:$0xff]
        %607 = vmatprep.subr.mxu0 0.0
        %608 = vmatpush1.msra.mxu0 0.0
        %609 = vmatprep.subr.mxu0 0.0
        %610 = vmatpush1.msra.mxu0 0.0
        %611 = vmatprep.subr.mxu0 0.0
        %612 = vmatpush1.msra.mxu0 0.0
        %613 = vmatprep.subr.mxu0 0.0
        %614 = vmatpush1.msra.mxu0 0.0
        %615 = vmatprep.subr.mxu0 0.0
        %616 = vmatpush1.msra.mxu0 0.0
        %617 = vmatprep.subr.mxu0 0.0
        %618 = vmatpush1.msra.mxu0 0.0
        %619 = vmatprep.subr.mxu0 0.0
        %620 = vmatpush1.msra.mxu0 0.0
        %621 = vmatprep.subr.mxu0 0.0
        %622 = vmatpush1.msra.mxu0 0.0
        %623 = vmatprep.subr.mxu0 0.0
        %624 = vmatpush1.msra.mxu0 0.0
        %625 = vmatprep.subr.mxu0 0.0
        %626 = vmatpush1.msra.mxu0 0.0
        %627 = vmatprep.subr.mxu0 0.0
        %628 = vmatpush1.msra.mxu0 0.0
        %629 = vmatprep.subr.mxu0 0.0
        %630 = vmatpush1.msra.mxu0 0.0
        %631 = vmatprep.subr.mxu0 0.0
        %632 = vmatpush1.msra.mxu0 %v606
        %633 = vmatprep.subr.mxu0 0.0
        %634 = vmatpush1.msra.mxu0 %v605
        %635 = vmatprep.subr.mxu0 0.0
        %636 = vmatpush1.msra.mxu0 %v604
        %637 = vmatprep.subr.mxu0 0.0
        %638 = vmatpush1.msra.mxu0 %v603
        %639 = vmatprep.subr.mxu0 0.0
        %640 = vmatpush2.msra.mxu0 0.0
        %641 = vmatprep.subr.mxu0 0.0
        %642 = vmatpush2.msra.mxu0 0.0
        %643 = vmatprep.subr.mxu0 0.0
        %644 = vmatpush2.msra.mxu0 0.0
        %645 = vmatprep.subr.mxu0 0.0
        %646 = vmatpush2.msra.mxu0 0.0
        %647 = vmatprep.subr.mxu0 0.0
        %648 = vmatpush2.msra.mxu0 0.0
        %649 = vmatprep.subr.mxu0 0.0
        %650 = vmatpush2.msra.mxu0 0.0
        %651 = vmatprep.subr.mxu0 0.0
        %652 = vmatpush2.msra.mxu0 0.0
        %653 = vmatprep.subr.mxu0 0.0
        %654 = vmatpush2.msra.mxu0 0.0
        %655 = vmatprep.subr.mxu0 0.0
        %656 = vmatpush2.msra.mxu0 0.0
        %657 = vmatprep.subr.mxu0 0.0
        %658 = vmatpush2.msra.mxu0 0.0
        %659 = vmatprep.subr.mxu0 0.0
        %660 = vmatpush2.msra.mxu0 0.0
        %661 = vmatprep.subr.mxu0 0.0
        %662 = vmatpush2.msra.mxu0 0.0
        %663 = vmatprep.subr.mxu0 0.0
        %664 = vmatpush2.msra.mxu0 0.0
        %665 = vmatprep.subr.mxu0 0.0
        %666 = vmatpush2.msra.mxu0 0.0
        %667 = vmatprep.subr.mxu0 0.0
        %668 = vmatpush2.msra.mxu0 0.0
        %669 = vmatprep.subr.mxu0 0.0
        %670 = vmatpush2.msra.mxu0 0.0
        %671 = vmatprep.mubr.f32.mxu0 0.0
        %672 = vmatmul.mubr.f32.gmra.mxu0 %v457
        %v673 = vpop.f32.mrf.mxu0
        %v674 = vadd.f32 0.0, %v673
        %v675 = vpop.f32.mrf.mxu0
        %676 = vdwg.mxu0
        %v677 = vld [vmem:[#allocation10] sm:$0xff]
        %v678 = vld [vmem:[#allocation10 + $0x8] sm:$0xff]
        %v679 = vld [vmem:[#allocation10 + $0x10] sm:$0xff]
        %v680 = vld [vmem:[#allocation10 + $0x18] sm:$0xff]
        %681 = vmatprep.subr.mxu0 0.0
        %682 = vmatpush1.msra.mxu0 0.0
        %683 = vmatprep.subr.mxu0 0.0
        %684 = vmatpush1.msra.mxu0 0.0
        %685 = vmatprep.subr.mxu0 0.0
        %686 = vmatpush1.msra.mxu0 0.0
        %687 = vmatprep.subr.mxu0 0.0
        %688 = vmatpush1.msra.mxu0 0.0
        %689 = vmatprep.subr.mxu0 0.0
        %690 = vmatpush1.msra.mxu0 0.0
        %691 = vmatprep.subr.mxu0 0.0
        %692 = vmatpush1.msra.mxu0 0.0
        %693 = vmatprep.subr.mxu0 0.0
        %694 = vmatpush1.msra.mxu0 0.0
        %695 = vmatprep.subr.mxu0 0.0
        %696 = vmatpush1.msra.mxu0 0.0
        %697 = vmatprep.subr.mxu0 0.0
        %698 = vmatpush1.msra.mxu0 0.0
        %699 = vmatprep.subr.mxu0 0.0
        %700 = vmatpush1.msra.mxu0 0.0
        %701 = vmatprep.subr.mxu0 0.0
        %702 = vmatpush1.msra.mxu0 0.0
        %703 = vmatprep.subr.mxu0 0.0
        %704 = vmatpush1.msra.mxu0 0.0
        %705 = vmatprep.subr.mxu0 0.0
        %706 = vmatpush1.msra.mxu0 %v680
        %707 = vmatprep.subr.mxu0 0.0
        %708 = vmatpush1.msra.mxu0 %v679
        %709 = vmatprep.subr.mxu0 0.0
        %710 = vmatpush1.msra.mxu0 %v678
        %711 = vmatprep.subr.mxu0 0.0
        %712 = vmatpush1.msra.mxu0 %v677
        %713 = vmatprep.subr.mxu0 0.0
        %714 = vmatpush2.msra.mxu0 0.0
        %715 = vmatprep.subr.mxu0 0.0
        %716 = vmatpush2.msra.mxu0 0.0
        %717 = vmatprep.subr.mxu0 0.0
        %718 = vmatpush2.msra.mxu0 0.0
        %719 = vmatprep.subr.mxu0 0.0
        %720 = vmatpush2.msra.mxu0 0.0
        %721 = vmatprep.subr.mxu0 0.0
        %722 = vmatpush2.msra.mxu0 0.0
        %723 = vmatprep.subr.mxu0 0.0
        %724 = vmatpush2.msra.mxu0 0.0
        %725 = vmatprep.subr.mxu0 0.0
        %726 = vmatpush2.msra.mxu0 0.0
        %727 = vmatprep.subr.mxu0 0.0
        %728 = vmatpush2.msra.mxu0 0.0
        %729 = vmatprep.subr.mxu0 0.0
        %730 = vmatpush2.msra.mxu0 0.0
        %731 = vmatprep.subr.mxu0 0.0
        %732 = vmatpush2.msra.mxu0 0.0
        %733 = vmatprep.subr.mxu0 0.0
        %734 = vmatpush2.msra.mxu0 0.0
        %735 = vmatprep.subr.mxu0 0.0
        %736 = vmatpush2.msra.mxu0 0.0
        %737 = vmatprep.subr.mxu0 0.0
        %738 = vmatpush2.msra.mxu0 0.0
        %739 = vmatprep.subr.mxu0 0.0
        %740 = vmatpush2.msra.mxu0 0.0
        %741 = vmatprep.subr.mxu0 0.0
        %742 = vmatpush2.msra.mxu0 0.0
        %743 = vmatprep.subr.mxu0 0.0
        %744 = vmatpush2.msra.mxu0 0.0
        %745 = vmatprep.mubr.f32.mxu0 0.0
        %746 = vmatmul.mubr.f32.gmra.mxu0 %v457
        %v747 = vpop.f32.mrf.mxu0
        %v748 = vadd.f32 0.0, %v747
        %v749 = vpop.f32.mrf.mxu0
        %750 = vdwg.mxu0
        %v751 = vld [vmem:[#allocation11] sm:$0xff]
        %v752 = vld [vmem:[#allocation11 + $0x8] sm:$0xff]
        %v753 = vld [vmem:[#allocation11 + $0x10] sm:$0xff]
        %v754 = vld [vmem:[#allocation11 + $0x18] sm:$0xff]
        %755 = vmatprep.subr.mxu0 0.0
        %756 = vmatpush1.msra.mxu0 0.0
        %757 = vmatprep.subr.mxu0 0.0
        %758 = vmatpush1.msra.mxu0 0.0
        %759 = vmatprep.subr.mxu0 0.0
        %760 = vmatpush1.msra.mxu0 0.0
        %761 = vmatprep.subr.mxu0 0.0
        %762 = vmatpush1.msra.mxu0 0.0
        %763 = vmatprep.subr.mxu0 0.0
        %764 = vmatpush1.msra.mxu0 0.0
        %765 = vmatprep.subr.mxu0 0.0
        %766 = vmatpush1.msra.mxu0 0.0
        %767 = vmatprep.subr.mxu0 0.0
        %768 = vmatpush1.msra.mxu0 0.0
        %769 = vmatprep.subr.mxu0 0.0
        %770 = vmatpush1.msra.mxu0 0.0
        %771 = vmatprep.subr.mxu0 0.0
        %772 = vmatpush1.msra.mxu0 0.0
        %773 = vmatprep.subr.mxu0 0.0
        %774 = vmatpush1.msra.mxu0 0.0
        %775 = vmatprep.subr.mxu0 0.0
        %776 = vmatpush1.msra.mxu0 0.0
        %777 = vmatprep.subr.mxu0 0.0
        %778 = vmatpush1.msra.mxu0 0.0
        %779 = vmatprep.subr.mxu0 0.0
        %780 = vmatpush1.msra.mxu0 %v754
        %781 = vmatprep.subr.mxu0 0.0
        %782 = vmatpush1.msra.mxu0 %v753
        %783 = vmatprep.subr.mxu0 0.0
        %784 = vmatpush1.msra.mxu0 %v752
        %785 = vmatprep.subr.mxu0 0.0
        %786 = vmatpush1.msra.mxu0 %v751
        %787 = vmatprep.subr.mxu0 0.0
        %788 = vmatpush2.msra.mxu0 0.0
        %789 = vmatprep.subr.mxu0 0.0
        %790 = vmatpush2.msra.mxu0 0.0
        %791 = vmatprep.subr.mxu0 0.0
        %792 = vmatpush2.msra.mxu0 0.0
        %793 = vmatprep.subr.mxu0 0.0
        %794 = vmatpush2.msra.mxu0 0.0
        %795 = vmatprep.subr.mxu0 0.0
        %796 = vmatpush2.msra.mxu0 0.0
        %797 = vmatprep.subr.mxu0 0.0
        %798 = vmatpush2.msra.mxu0 0.0
        %799 = vmatprep.subr.mxu0 0.0
        %800 = vmatpush2.msra.mxu0 0.0
        %801 = vmatprep.subr.mxu0 0.0
        %802 = vmatpush2.msra.mxu0 0.0
        %803 = vmatprep.subr.mxu0 0.0
        %804 = vmatpush2.msra.mxu0 0.0
        %805 = vmatprep.subr.mxu0 0.0
        %806 = vmatpush2.msra.mxu0 0.0
        %807 = vmatprep.subr.mxu0 0.0
        %808 = vmatpush2.msra.mxu0 0.0
        %809 = vmatprep.subr.mxu0 0.0
        %810 = vmatpush2.msra.mxu0 0.0
        %811 = vmatprep.subr.mxu0 0.0
        %812 = vmatpush2.msra.mxu0 0.0
        %813 = vmatprep.subr.mxu0 0.0
        %814 = vmatpush2.msra.mxu0 0.0
        %815 = vmatprep.subr.mxu0 0.0
        %816 = vmatpush2.msra.mxu0 0.0
        %817 = vmatprep.subr.mxu0 0.0
        %818 = vmatpush2.msra.mxu0 0.0
        %819 = vmatprep.mubr.f32.mxu0 0.0
        %820 = vmatmul.mubr.f32.gmra.mxu0 %v457
        %v821 = vpop.f32.mrf.mxu0
        %v822 = vadd.f32 0.0, %v821
        %v823 = vpop.f32.mrf.mxu0
        %824 = vdwg.mxu0
        %v825 = vmul.f32 %v449, %v526
        %v826 = vmul.f32 %v450, %v600
        %v827 = vadd.f32 %v825, %v826
        %v828 = vmul.f32 %v449, %v674
        %v829 = vmul.f32 %v450, %v748
        %v830 = vadd.f32 %v828, %v829
        %v831 = vlaneseq
        %v832 = vshrl.u32 %v831, 7
        %v833 = vlaneseq
        %v834 = vand.u32 %v833, 127
        %vm835 = vcmp.le.s32.totalorder %v834, %v832
        %v836 = vsel %vm835, 0.0, -1e+30
        %vm837 = vcmask 64512
        %v839 = vsel %vm837, %v827, 0
        %v842 = vsel %vm837, %v830, 0
        %844 = vmatprep.subr.mxu0 0.0
        %845 = vmatpush1.xpose.msra.mxu0 0.0
        %846 = vmatprep.subr.mxu0 0.0
        %847 = vmatpush1.xpose.msra.mxu0 0.0
        %848 = vmatprep.subr.mxu0 0.0
        %849 = vmatpush1.xpose.msra.mxu0 0.0
        %850 = vmatprep.subr.mxu0 0.0
        %851 = vmatpush1.xpose.msra.mxu0 0.0
        %852 = vmatprep.subr.mxu0 0.0
        %853 = vmatpush1.xpose.msra.mxu0 0.0
        %854 = vmatprep.subr.mxu0 0.0
        %855 = vmatpush1.xpose.msra.mxu0 0.0
        %856 = vmatprep.subr.mxu0 0.0
        %857 = vmatpush1.xpose.msra.mxu0 0.0
        %858 = vmatprep.subr.mxu0 0.0
        %859 = vmatpush1.xpose.msra.mxu0 0.0
        %860 = vmatprep.subr.mxu0 0.0
        %861 = vmatpush1.xpose.msra.mxu0 0.0
        %862 = vmatprep.subr.mxu0 0.0
        %863 = vmatpush1.xpose.msra.mxu0 0.0
        %864 = vmatprep.subr.mxu0 0.0
        %865 = vmatpush1.xpose.msra.mxu0 0.0
        %866 = vmatprep.subr.mxu0 0.0
        %867 = vmatpush1.xpose.msra.mxu0 0.0
        %868 = vmatprep.subr.mxu0 0.0
        %869 = vmatpush1.xpose.msra.mxu0 0.0
        %870 = vmatprep.subr.mxu0 0.0
        %871 = vmatpush1.xpose.msra.mxu0 0.0
        %872 = vmatprep.subr.mxu0 0.0
        %873 = vmatpush1.xpose.msra.mxu0 0.0
        %874 = vmatprep.subr.mxu0 0.0
        %875 = vmatpush1.xpose.msra.mxu0 %v842
        %876 = vmatprep.subr.mxu0 0.0
        %877 = vmatpush2.xpose.msra.mxu0 0.0
        %878 = vmatprep.subr.mxu0 0.0
        %879 = vmatpush2.xpose.msra.mxu0 0.0
        %880 = vmatprep.subr.mxu0 0.0
        %881 = vmatpush2.xpose.msra.mxu0 0.0
        %882 = vmatprep.subr.mxu0 0.0
        %883 = vmatpush2.xpose.msra.mxu0 0.0
        %884 = vmatprep.subr.mxu0 0.0
        %885 = vmatpush2.xpose.msra.mxu0 0.0
        %886 = vmatprep.subr.mxu0 0.0
        %887 = vmatpush2.xpose.msra.mxu0 0.0
        %888 = vmatprep.subr.mxu0 0.0
        %889 = vmatpush2.xpose.msra.mxu0 0.0
        %890 = vmatprep.subr.mxu0 0.0
        %891 = vmatpush2.xpose.msra.mxu0 0.0
        %892 = vmatprep.subr.mxu0 0.0
        %893 = vmatpush2.xpose.msra.mxu0 0.0
        %894 = vmatprep.subr.mxu0 0.0
        %895 = vmatpush2.xpose.msra.mxu0 0.0
        %896 = vmatprep.subr.mxu0 0.0
        %897 = vmatpush2.xpose.msra.mxu0 0.0
        %898 = vmatprep.subr.mxu0 0.0
        %899 = vmatpush2.xpose.msra.mxu0 0.0
        %900 = vmatprep.subr.mxu0 0.0
        %901 = vmatpush2.xpose.msra.mxu0 0.0
        %902 = vmatprep.subr.mxu0 0.0
        %903 = vmatpush2.xpose.msra.mxu0 0.0
        %904 = vmatprep.subr.mxu0 0.0
        %905 = vmatpush2.xpose.msra.mxu0 0.0
        %906 = vmatprep.subr.mxu0 0.0
        %907 = vmatpush2.xpose.msra.mxu0 0.0
        %908 = vmatprep.mubr.f32.mxu0 0.0
        %909 = vmatmul.mubr.f32.gmra.mxu0 %v839
        %v910 = vpop.f32.mrf.mxu0
        %v911 = vadd.f32 %v836, %v910
        %v912 = vpop.f32.mrf.mxu0
        %913 = vdwg.mxu0
        %v914 = vsel %vm837, %v911, -inf
        %915 = vmax.xlane.f32.xlu0 %v914
        %v916 = vpop.xlane.xlu0 %915
        %v917 = vsub.f32 %v911, %v916
        %v918 = vmul.f32 %v917, 1.442695
        %v919 = vpow.pop %v918
        %v920 = vsel %vm837, %v919, 0.0
        %921 = vadd.xlane.f32.xlu0 %v920
        %v922 = vpop.xlane.xlu0 %921
        %v923 = vrcp.pop %v922
        %v924 = vmul.f32 %v919, %v923
        %v926 = vsel %vm837, %v924, 0
        %928 = vmatprep.subr.mxu0 0.0
        %929 = vmatpush1.msra.mxu0 0.0
        %930 = vmatprep.subr.mxu0 0.0
        %931 = vmatpush1.msra.mxu0 0.0
        %932 = vmatprep.subr.mxu0 0.0
        %933 = vmatpush1.msra.mxu0 0.0
        %934 = vmatprep.subr.mxu0 0.0
        %935 = vmatpush1.msra.mxu0 0.0
        %936 = vmatprep.subr.mxu0 0.0
        %937 = vmatpush1.msra.mxu0 0.0
        %938 = vmatprep.subr.mxu0 0.0
        %939 = vmatpush1.msra.mxu0 0.0
        %940 = vmatprep.subr.mxu0 0.0
        %941 = vmatpush1.msra.mxu0 0.0
        %942 = vmatprep.subr.mxu0 0.0
        %943 = vmatpush1.msra.mxu0 0.0
        %944 = vmatprep.subr.mxu0 0.0
        %945 = vmatpush1.msra.mxu0 0.0
        %946 = vmatprep.subr.mxu0 0.0
        %947 = vmatpush1.msra.mxu0 0.0
        %948 = vmatprep.subr.mxu0 0.0
        %949 = vmatpush1.msra.mxu0 0.0
        %950 = vmatprep.subr.mxu0 0.0
        %951 = vmatpush1.msra.mxu0 0.0
        %952 = vmatprep.subr.mxu0 0.0
        %953 = vmatpush1.msra.mxu0 0.0
        %954 = vmatprep.subr.mxu0 0.0
        %955 = vmatpush1.msra.mxu0 0.0
        %956 = vmatprep.subr.mxu0 0.0
        %957 = vmatpush1.msra.mxu0 0.0
        %958 = vmatprep.subr.mxu0 0.0
        %959 = vmatpush1.msra.mxu0 %v822
        %960 = vmatprep.subr.mxu0 0.0
        %961 = vmatpush2.msra.mxu0 0.0
        %962 = vmatprep.subr.mxu0 0.0
        %963 = vmatpush2.msra.mxu0 0.0
        %964 = vmatprep.subr.mxu0 0.0
        %965 = vmatpush2.msra.mxu0 0.0
        %966 = vmatprep.subr.mxu0 0.0
        %967 = vmatpush2.msra.mxu0 0.0
        %968 = vmatprep.subr.mxu0 0.0
        %969 = vmatpush2.msra.mxu0 0.0
        %970 = vmatprep.subr.mxu0 0.0
        %971 = vmatpush2.msra.mxu0 0.0
        %972 = vmatprep.subr.mxu0 0.0
        %973 = vmatpush2.msra.mxu0 0.0
        %974 = vmatprep.subr.mxu0 0.0
        %975 = vmatpush2.msra.mxu0 0.0
        %976 = vmatprep.subr.mxu0 0.0
        %977 = vmatpush2.msra.mxu0 0.0
        %978 = vmatprep.subr.mxu0 0.0
        %979 = vmatpush2.msra.mxu0 0.0
        %980 = vmatprep.subr.mxu0 0.0
        %981 = vmatpush2.msra.mxu0 0.0
        %982 = vmatprep.subr.mxu0 0.0
        %983 = vmatpush2.msra.mxu0 0.0
        %984 = vmatprep.subr.mxu0 0.0
        %985 = vmatpush2.msra.mxu0 0.0
        %986 = vmatprep.subr.mxu0 0.0
        %987 = vmatpush2.msra.mxu0 0.0
        %988 = vmatprep.subr.mxu0 0.0
        %989 = vmatpush2.msra.mxu0 0.0
        %990 = vmatprep.subr.mxu0 0.0
        %991 = vmatpush2.msra.mxu0 0.0
        %992 = vmatprep.mubr.f32.mxu0 0.0
        %993 = vmatmul.mubr.f32.gmra.mxu0 %v926
        %v994 = vpop.f32.mrf.mxu0
        %v995 = vadd.f32 0.0, %v994
        %v996 = vpop.f32.mrf.mxu0
        %997 = vdwg.mxu0
        %v998 = vld [vmem:[#allocation13] sm:$0xff]
        %999 = vrot.lane.b32.xlu0 %v827, 120
        %v1000 = vpop.permute.xlu0 %999
        %1001 = vrot.lane.b32.xlu0 %v830, 120
        %v1002 = vpop.permute.xlu0 %1001
        %v1003 = vsel %vm837, %v1000, 0
        %v1005 = vsel %vm837, %v1002, 0
        %1007 = vmatprep.subr.mxu0 0.0
        %1008 = vmatpush1.xpose.msra.mxu0 0.0
        %1009 = vmatprep.subr.mxu0 0.0
        %1010 = vmatpush1.xpose.msra.mxu0 0.0
        %1011 = vmatprep.subr.mxu0 0.0
        %1012 = vmatpush1.xpose.msra.mxu0 0.0
        %1013 = vmatprep.subr.mxu0 0.0
        %1014 = vmatpush1.xpose.msra.mxu0 0.0
        %1015 = vmatprep.subr.mxu0 0.0
        %1016 = vmatpush1.xpose.msra.mxu0 0.0
        %1017 = vmatprep.subr.mxu0 0.0
        %1018 = vmatpush1.xpose.msra.mxu0 0.0
        %1019 = vmatprep.subr.mxu0 0.0
        %1020 = vmatpush1.xpose.msra.mxu0 0.0
        %1021 = vmatprep.subr.mxu0 0.0
        %1022 = vmatpush1.xpose.msra.mxu0 0.0
        %1023 = vmatprep.subr.mxu0 0.0
        %1024 = vmatpush1.xpose.msra.mxu0 0.0
        %1025 = vmatprep.subr.mxu0 0.0
        %1026 = vmatpush1.xpose.msra.mxu0 0.0
        %1027 = vmatprep.subr.mxu0 0.0
        %1028 = vmatpush1.xpose.msra.mxu0 0.0
        %1029 = vmatprep.subr.mxu0 0.0
        %1030 = vmatpush1.xpose.msra.mxu0 0.0
        %1031 = vmatprep.subr.mxu0 0.0
        %1032 = vmatpush1.xpose.msra.mxu0 0.0
        %1033 = vmatprep.subr.mxu0 0.0
        %1034 = vmatpush1.xpose.msra.mxu0 0.0
        %1035 = vmatprep.subr.mxu0 0.0
        %1036 = vmatpush1.xpose.msra.mxu0 0.0
        %1037 = vmatprep.subr.mxu0 0.0
        %1038 = vmatpush1.xpose.msra.mxu0 %v1005
        %1039 = vmatprep.subr.mxu0 0.0
        %1040 = vmatpush2.xpose.msra.mxu0 0.0
        %1041 = vmatprep.subr.mxu0 0.0
        %1042 = vmatpush2.xpose.msra.mxu0 0.0
        %1043 = vmatprep.subr.mxu0 0.0
        %1044 = vmatpush2.xpose.msra.mxu0 0.0
        %1045 = vmatprep.subr.mxu0 0.0
        %1046 = vmatpush2.xpose.msra.mxu0 0.0
        %1047 = vmatprep.subr.mxu0 0.0
        %1048 = vmatpush2.xpose.msra.mxu0 0.0
        %1049 = vmatprep.subr.mxu0 0.0
        %1050 = vmatpush2.xpose.msra.mxu0 0.0
        %1051 = vmatprep.subr.mxu0 0.0
        %1052 = vmatpush2.xpose.msra.mxu0 0.0
        %1053 = vmatprep.subr.mxu0 0.0
        %1054 = vmatpush2.xpose.msra.mxu0 0.0
        %1055 = vmatprep.subr.mxu0 0.0
        %1056 = vmatpush2.xpose.msra.mxu0 0.0
        %1057 = vmatprep.subr.mxu0 0.0
        %1058 = vmatpush2.xpose.msra.mxu0 0.0
        %1059 = vmatprep.subr.mxu0 0.0
        %1060 = vmatpush2.xpose.msra.mxu0 0.0
        %1061 = vmatprep.subr.mxu0 0.0
        %1062 = vmatpush2.xpose.msra.mxu0 0.0
        %1063 = vmatprep.subr.mxu0 0.0
        %1064 = vmatpush2.xpose.msra.mxu0 0.0
        %1065 = vmatprep.subr.mxu0 0.0
        %1066 = vmatpush2.xpose.msra.mxu0 0.0
        %1067 = vmatprep.subr.mxu0 0.0
        %1068 = vmatpush2.xpose.msra.mxu0 0.0
        %1069 = vmatprep.subr.mxu0 0.0
        %1070 = vmatpush2.xpose.msra.mxu0 0.0
        %1071 = vmatprep.mubr.f32.mxu0 0.0
        %1072 = vmatmul.mubr.f32.gmra.mxu0 %v1003
        %v1073 = vpop.f32.mrf.mxu0
        %v1074 = vadd.f32 %v836, %v1073
        %v1075 = vpop.f32.mrf.mxu0
        %1076 = vdwg.mxu0
        %v1077 = vsel %vm837, %v1074, -inf
        %1078 = vmax.xlane.f32.xlu0 %v1077
        %v1079 = vpop.xlane.xlu0 %1078
        %v1080 = vsub.f32 %v1074, %v1079
        %v1081 = vmul.f32 %v1080, 1.442695
        %v1082 = vpow.pop %v1081
        %v1083 = vsel %vm837, %v1082, 0.0
        %1084 = vadd.xlane.f32.xlu0 %v1083
        %v1085 = vpop.xlane.xlu0 %1084
        %v1086 = vrcp.pop %v1085
        %v1087 = vmul.f32 %v1082, %v1086
        %1089 = vrot.lane.b32.xlu0 %v822, 120
        %v1090 = vpop.permute.xlu0 %1089
        %v1093 = vsel %vm837, %v1087, 0
        %1095 = vmatprep.subr.mxu0 0.0
        %1096 = vmatpush1.msra.mxu0 0.0
        %1097 = vmatprep.subr.mxu0 0.0
        %1098 = vmatpush1.msra.mxu0 0.0
        %1099 = vmatprep.subr.mxu0 0.0
        %1100 = vmatpush1.msra.mxu0 0.0
        %1101 = vmatprep.subr.mxu0 0.0
        %1102 = vmatpush1.msra.mxu0 0.0
        %1103 = vmatprep.subr.mxu0 0.0
        %1104 = vmatpush1.msra.mxu0 0.0
        %1105 = vmatprep.subr.mxu0 0.0
        %1106 = vmatpush1.msra.mxu0 0.0
        %1107 = vmatprep.subr.mxu0 0.0
        %1108 = vmatpush1.msra.mxu0 0.0
        %1109 = vmatprep.subr.mxu0 0.0
        %1110 = vmatpush1.msra.mxu0 0.0
        %1111 = vmatprep.subr.mxu0 0.0
        %1112 = vmatpush1.msra.mxu0 0.0
        %1113 = vmatprep.subr.mxu0 0.0
        %1114 = vmatpush1.msra.mxu0 0.0
        %1115 = vmatprep.subr.mxu0 0.0
        %1116 = vmatpush1.msra.mxu0 0.0
        %1117 = vmatprep.subr.mxu0 0.0
        %1118 = vmatpush1.msra.mxu0 0.0
        %1119 = vmatprep.subr.mxu0 0.0
        %1120 = vmatpush1.msra.mxu0 0.0
        %1121 = vmatprep.subr.mxu0 0.0
        %1122 = vmatpush1.msra.mxu0 0.0
        %1123 = vmatprep.subr.mxu0 0.0
        %1124 = vmatpush1.msra.mxu0 0.0
        %1125 = vmatprep.subr.mxu0 0.0
        %1126 = vmatpush1.msra.mxu0 %v1090
        %1127 = vmatprep.subr.mxu0 0.0
        %1128 = vmatpush2.msra.mxu0 0.0
        %1129 = vmatprep.subr.mxu0 0.0
        %1130 = vmatpush2.msra.mxu0 0.0
        %1131 = vmatprep.subr.mxu0 0.0
        %1132 = vmatpush2.msra.mxu0 0.0
        %1133 = vmatprep.subr.mxu0 0.0
        %1134 = vmatpush2.msra.mxu0 0.0
        %1135 = vmatprep.subr.mxu0 0.0
        %1136 = vmatpush2.msra.mxu0 0.0
        %1137 = vmatprep.subr.mxu0 0.0
        %1138 = vmatpush2.msra.mxu0 0.0
        %1139 = vmatprep.subr.mxu0 0.0
        %1140 = vmatpush2.msra.mxu0 0.0
        %1141 = vmatprep.subr.mxu0 0.0
        %1142 = vmatpush2.msra.mxu0 0.0
        %1143 = vmatprep.subr.mxu0 0.0
        %1144 = vmatpush2.msra.mxu0 0.0
        %1145 = vmatprep.subr.mxu0 0.0
        %1146 = vmatpush2.msra.mxu0 0.0
        %1147 = vmatprep.subr.mxu0 0.0
        %1148 = vmatpush2.msra.mxu0 0.0
        %1149 = vmatprep.subr.mxu0 0.0
        %1150 = vmatpush2.msra.mxu0 0.0
        %1151 = vmatprep.subr.mxu0 0.0
        %1152 = vmatpush2.msra.mxu0 0.0
        %1153 = vmatprep.subr.mxu0 0.0
        %1154 = vmatpush2.msra.mxu0 0.0
        %1155 = vmatprep.subr.mxu0 0.0
        %1156 = vmatpush2.msra.mxu0 0.0
        %1157 = vmatprep.subr.mxu0 0.0
        %1158 = vmatpush2.msra.mxu0 0.0
        %1159 = vmatprep.mubr.f32.mxu0 0.0
        %1160 = vmatmul.mubr.f32.gmra.mxu0 %v1093
        %v1161 = vpop.f32.mrf.mxu0
        %v1162 = vadd.f32 0.0, %v1161
        %v1163 = vpop.f32.mrf.mxu0
        %1164 = vdwg.mxu0
        %v1165 = vld [vmem:[#allocation13 + $0x8] sm:$0xff]
        %v1167 = vsel %vm837, %v1162, 0
        %1169 = vmatprep.subr.mxu0 0.0
        %1170 = vmatpush1.msra.mxu0 0.0
        %1171 = vmatprep.subr.mxu0 0.0
        %1172 = vmatpush1.msra.mxu0 0.0
        %1173 = vmatprep.subr.mxu0 0.0
        %1174 = vmatpush1.msra.mxu0 0.0
        %1175 = vmatprep.subr.mxu0 0.0
        %1176 = vmatpush1.msra.mxu0 0.0
        %1177 = vmatprep.subr.mxu0 0.0
        %1178 = vmatpush1.msra.mxu0 0.0
        %1179 = vmatprep.subr.mxu0 0.0
        %1180 = vmatpush1.msra.mxu0 0.0
        %1181 = vmatprep.subr.mxu0 0.0
        %1182 = vmatpush1.msra.mxu0 0.0
        %1183 = vmatprep.subr.mxu0 0.0
        %1184 = vmatpush1.msra.mxu0 0.0
        %1185 = vmatprep.subr.mxu0 0.0
        %1186 = vmatpush1.msra.mxu0 0.0
        %1187 = vmatprep.subr.mxu0 0.0
        %1188 = vmatpush1.msra.mxu0 0.0
        %1189 = vmatprep.subr.mxu0 0.0
        %1190 = vmatpush1.msra.mxu0 0.0
        %1191 = vmatprep.subr.mxu0 0.0
        %1192 = vmatpush1.msra.mxu0 0.0
        %1193 = vmatprep.subr.mxu0 0.0
        %1194 = vmatpush1.msra.mxu0 0.0
        %1195 = vmatprep.subr.mxu0 0.0
        %1196 = vmatpush1.msra.mxu0 0.0
        %1197 = vmatprep.subr.mxu0 0.0
        %1198 = vmatpush1.msra.mxu0 0.0
        %1199 = vmatprep.subr.mxu0 0.0
        %1200 = vmatpush1.msra.mxu0 %v1165
        %1201 = vmatprep.subr.mxu0 0.0
        %1202 = vmatpush2.msra.mxu0 0.0
        %1203 = vmatprep.subr.mxu0 0.0
        %1204 = vmatpush2.msra.mxu0 0.0
        %1205 = vmatprep.subr.mxu0 0.0
        %1206 = vmatpush2.msra.mxu0 0.0
        %1207 = vmatprep.subr.mxu0 0.0
        %1208 = vmatpush2.msra.mxu0 0.0
        %1209 = vmatprep.subr.mxu0 0.0
        %1210 = vmatpush2.msra.mxu0 0.0
        %1211 = vmatprep.subr.mxu0 0.0
        %1212 = vmatpush2.msra.mxu0 0.0
        %1213 = vmatprep.subr.mxu0 0.0
        %1214 = vmatpush2.msra.mxu0 0.0
        %1215 = vmatprep.subr.mxu0 0.0
        %1216 = vmatpush2.msra.mxu0 0.0
        %1217 = vmatprep.subr.mxu0 0.0
        %1218 = vmatpush2.msra.mxu0 0.0
        %1219 = vmatprep.subr.mxu0 0.0
        %1220 = vmatpush2.msra.mxu0 0.0
        %1221 = vmatprep.subr.mxu0 0.0
        %1222 = vmatpush2.msra.mxu0 0.0
        %1223 = vmatprep.subr.mxu0 0.0
        %1224 = vmatpush2.msra.mxu0 0.0
        %1225 = vmatprep.subr.mxu0 0.0
        %1226 = vmatpush2.msra.mxu0 0.0
        %1227 = vmatprep.subr.mxu0 0.0
        %1228 = vmatpush2.msra.mxu0 0.0
        %1229 = vmatprep.subr.mxu0 0.0
        %1230 = vmatpush2.msra.mxu0 0.0
        %1231 = vmatprep.subr.mxu0 0.0
        %1232 = vmatpush2.msra.mxu0 0.0
        %1233 = vmatprep.mubr.f32.mxu0 0.0
        %1234 = vmatmul.mubr.f32.gmra.mxu0 %v1167
        %v1235 = vpop.f32.mrf.mxu0
        %v1236 = vadd.f32 0.0, %v1235
        %v1237 = vpop.f32.mrf.mxu0
        %1238 = vdwg.mxu0
        %v1240 = vsel %vm837, %v995, 0
        %1242 = vmatprep.subr.mxu0 0.0
        %1243 = vmatpush1.msra.mxu0 0.0
        %1244 = vmatprep.subr.mxu0 0.0
        %1245 = vmatpush1.msra.mxu0 0.0
        %1246 = vmatprep.subr.mxu0 0.0
        %1247 = vmatpush1.msra.mxu0 0.0
        %1248 = vmatprep.subr.mxu0 0.0
        %1249 = vmatpush1.msra.mxu0 0.0
        %1250 = vmatprep.subr.mxu0 0.0
        %1251 = vmatpush1.msra.mxu0 0.0
        %1252 = vmatprep.subr.mxu0 0.0
        %1253 = vmatpush1.msra.mxu0 0.0
        %1254 = vmatprep.subr.mxu0 0.0
        %1255 = vmatpush1.msra.mxu0 0.0
        %1256 = vmatprep.subr.mxu0 0.0
        %1257 = vmatpush1.msra.mxu0 0.0
        %1258 = vmatprep.subr.mxu0 0.0
        %1259 = vmatpush1.msra.mxu0 0.0
        %1260 = vmatprep.subr.mxu0 0.0
        %1261 = vmatpush1.msra.mxu0 0.0
        %1262 = vmatprep.subr.mxu0 0.0
        %1263 = vmatpush1.msra.mxu0 0.0
        %1264 = vmatprep.subr.mxu0 0.0
        %1265 = vmatpush1.msra.mxu0 0.0
        %1266 = vmatprep.subr.mxu0 0.0
        %1267 = vmatpush1.msra.mxu0 0.0
        %1268 = vmatprep.subr.mxu0 0.0
        %1269 = vmatpush1.msra.mxu0 0.0
        %1270 = vmatprep.subr.mxu0 0.0
        %1271 = vmatpush1.msra.mxu0 0.0
        %1272 = vmatprep.subr.mxu0 0.0
        %1273 = vmatpush1.msra.mxu0 %v998
        %1274 = vmatprep.subr.mxu0 0.0
        %1275 = vmatpush2.msra.mxu0 0.0
        %1276 = vmatprep.subr.mxu0 0.0
        %1277 = vmatpush2.msra.mxu0 0.0
        %1278 = vmatprep.subr.mxu0 0.0
        %1279 = vmatpush2.msra.mxu0 0.0
        %1280 = vmatprep.subr.mxu0 0.0
        %1281 = vmatpush2.msra.mxu0 0.0
        %1282 = vmatprep.subr.mxu0 0.0
        %1283 = vmatpush2.msra.mxu0 0.0
        %1284 = vmatprep.subr.mxu0 0.0
        %1285 = vmatpush2.msra.mxu0 0.0
        %1286 = vmatprep.subr.mxu0 0.0
        %1287 = vmatpush2.msra.mxu0 0.0
        %1288 = vmatprep.subr.mxu0 0.0
        %1289 = vmatpush2.msra.mxu0 0.0
        %1290 = vmatprep.subr.mxu0 0.0
        %1291 = vmatpush2.msra.mxu0 0.0
        %1292 = vmatprep.subr.mxu0 0.0
        %1293 = vmatpush2.msra.mxu0 0.0
        %1294 = vmatprep.subr.mxu0 0.0
        %1295 = vmatpush2.msra.mxu0 0.0
        %1296 = vmatprep.subr.mxu0 0.0
        %1297 = vmatpush2.msra.mxu0 0.0
        %1298 = vmatprep.subr.mxu0 0.0
        %1299 = vmatpush2.msra.mxu0 0.0
        %1300 = vmatprep.subr.mxu0 0.0
        %1301 = vmatpush2.msra.mxu0 0.0
        %1302 = vmatprep.subr.mxu0 0.0
        %1303 = vmatpush2.msra.mxu0 0.0
        %1304 = vmatprep.subr.mxu0 0.0
        %1305 = vmatpush2.msra.mxu0 0.0
        %1306 = vmatprep.mubr.f32.mxu0 0.0
        %1307 = vmatmul.mubr.f32.gmra.mxu0 %v1240
        %v1308 = vpop.f32.mrf.mxu0
        %v1309 = vadd.f32 %v1236, %v1308
        %v1310 = vpop.f32.mrf.mxu0
        %1311 = vdwg.mxu0
        %1312 = vrot.lane.b32.xlu0 %v827, 112
        %v1313 = vpop.permute.xlu0 %1312
        %1314 = vrot.lane.b32.xlu0 %v830, 112
        %v1315 = vpop.permute.xlu0 %1314
        %v1316 = vsel %vm837, %v1313, 0
        %v1318 = vsel %vm837, %v1315, 0
        %1320 = vmatprep.subr.mxu0 0.0
        %1321 = vmatpush1.xpose.msra.mxu0 0.0
        %1322 = vmatprep.subr.mxu0 0.0
        %1323 = vmatpush1.xpose.msra.mxu0 0.0
        %1324 = vmatprep.subr.mxu0 0.0
        %1325 = vmatpush1.xpose.msra.mxu0 0.0
        %1326 = vmatprep.subr.mxu0 0.0
        %1327 = vmatpush1.xpose.msra.mxu0 0.0
        %1328 = vmatprep.subr.mxu0 0.0
        %1329 = vmatpush1.xpose.msra.mxu0 0.0
        %1330 = vmatprep.subr.mxu0 0.0
        %1331 = vmatpush1.xpose.msra.mxu0 0.0
        %1332 = vmatprep.subr.mxu0 0.0
        %1333 = vmatpush1.xpose.msra.mxu0 0.0
        %1334 = vmatprep.subr.mxu0 0.0
        %1335 = vmatpush1.xpose.msra.mxu0 0.0
        %1336 = vmatprep.subr.mxu0 0.0
        %1337 = vmatpush1.xpose.msra.mxu0 0.0
        %1338 = vmatprep.subr.mxu0 0.0
        %1339 = vmatpush1.xpose.msra.mxu0 0.0
        %1340 = vmatprep.subr.mxu0 0.0
        %1341 = vmatpush1.xpose.msra.mxu0 0.0
        %1342 = vmatprep.subr.mxu0 0.0
        %1343 = vmatpush1.xpose.msra.mxu0 0.0
        %1344 = vmatprep.subr.mxu0 0.0
        %1345 = vmatpush1.xpose.msra.mxu0 0.0
        %1346 = vmatprep.subr.mxu0 0.0
        %1347 = vmatpush1.xpose.msra.mxu0 0.0
        %1348 = vmatprep.subr.mxu0 0.0
        %1349 = vmatpush1.xpose.msra.mxu0 0.0
        %1350 = vmatprep.subr.mxu0 0.0
        %1351 = vmatpush1.xpose.msra.mxu0 %v1318
        %1352 = vmatprep.subr.mxu0 0.0
        %1353 = vmatpush2.xpose.msra.mxu0 0.0
        %1354 = vmatprep.subr.mxu0 0.0
        %1355 = vmatpush2.xpose.msra.mxu0 0.0
        %1356 = vmatprep.subr.mxu0 0.0
        %1357 = vmatpush2.xpose.msra.mxu0 0.0
        %1358 = vmatprep.subr.mxu0 0.0
        %1359 = vmatpush2.xpose.msra.mxu0 0.0
        %1360 = vmatprep.subr.mxu0 0.0
        %1361 = vmatpush2.xpose.msra.mxu0 0.0
        %1362 = vmatprep.subr.mxu0 0.0
        %1363 = vmatpush2.xpose.msra.mxu0 0.0
        %1364 = vmatprep.subr.mxu0 0.0
        %1365 = vmatpush2.xpose.msra.mxu0 0.0
        %1366 = vmatprep.subr.mxu0 0.0
        %1367 = vmatpush2.xpose.msra.mxu0 0.0
        %1368 = vmatprep.subr.mxu0 0.0
        %1369 = vmatpush2.xpose.msra.mxu0 0.0
        %1370 = vmatprep.subr.mxu0 0.0
        %1371 = vmatpush2.xpose.msra.mxu0 0.0
        %1372 = vmatprep.subr.mxu0 0.0
        %1373 = vmatpush2.xpose.msra.mxu0 0.0
        %1374 = vmatprep.subr.mxu0 0.0
        %1375 = vmatpush2.xpose.msra.mxu0 0.0
        %1376 = vmatprep.subr.mxu0 0.0
        %1377 = vmatpush2.xpose.msra.mxu0 0.0
        %1378 = vmatprep.subr.mxu0 0.0
        %1379 = vmatpush2.xpose.msra.mxu0 0.0
        %1380 = vmatprep.subr.mxu0 0.0
        %1381 = vmatpush2.xpose.msra.mxu0 0.0
        %1382 = vmatprep.subr.mxu0 0.0
        %1383 = vmatpush2.xpose.msra.mxu0 0.0
        %1384 = vmatprep.mubr.f32.mxu0 0.0
        %1385 = vmatmul.mubr.f32.gmra.mxu0 %v1316
        %v1386 = vpop.f32.mrf.mxu0
        %v1387 = vadd.f32 %v836, %v1386
        %v1388 = vpop.f32.mrf.mxu0
        %1389 = vdwg.mxu0
        %v1390 = vsel %vm837, %v1387, -inf
        %1391 = vmax.xlane.f32.xlu0 %v1390
        %v1392 = vpop.xlane.xlu0 %1391
        %v1393 = vsub.f32 %v1387, %v1392
        %v1394 = vmul.f32 %v1393, 1.442695
        %v1395 = vpow.pop %v1394
        %v1396 = vsel %vm837, %v1395, 0.0
        %1397 = vadd.xlane.f32.xlu0 %v1396
        %v1398 = vpop.xlane.xlu0 %1397
        %v1399 = vrcp.pop %v1398
        %v1400 = vmul.f32 %v1395, %v1399
        %1401 = vrot.lane.b32.xlu0 %v822, 112
        %v1402 = vpop.permute.xlu0 %1401
        %v1405 = vsel %vm837, %v1400, 0
        %1407 = vmatprep.subr.mxu0 0.0
        %1408 = vmatpush1.msra.mxu0 0.0
        %1409 = vmatprep.subr.mxu0 0.0
        %1410 = vmatpush1.msra.mxu0 0.0
        %1411 = vmatprep.subr.mxu0 0.0
        %1412 = vmatpush1.msra.mxu0 0.0
        %1413 = vmatprep.subr.mxu0 0.0
        %1414 = vmatpush1.msra.mxu0 0.0
        %1415 = vmatprep.subr.mxu0 0.0
        %1416 = vmatpush1.msra.mxu0 0.0
        %1417 = vmatprep.subr.mxu0 0.0
        %1418 = vmatpush1.msra.mxu0 0.0
        %1419 = vmatprep.subr.mxu0 0.0
        %1420 = vmatpush1.msra.mxu0 0.0
        %1421 = vmatprep.subr.mxu0 0.0
        %1422 = vmatpush1.msra.mxu0 0.0
        %1423 = vmatprep.subr.mxu0 0.0
        %1424 = vmatpush1.msra.mxu0 0.0
        %1425 = vmatprep.subr.mxu0 0.0
        %1426 = vmatpush1.msra.mxu0 0.0
        %1427 = vmatprep.subr.mxu0 0.0
        %1428 = vmatpush1.msra.mxu0 0.0
        %1429 = vmatprep.subr.mxu0 0.0
        %1430 = vmatpush1.msra.mxu0 0.0
        %1431 = vmatprep.subr.mxu0 0.0
        %1432 = vmatpush1.msra.mxu0 0.0
        %1433 = vmatprep.subr.mxu0 0.0
        %1434 = vmatpush1.msra.mxu0 0.0
        %1435 = vmatprep.subr.mxu0 0.0
        %1436 = vmatpush1.msra.mxu0 0.0
        %1437 = vmatprep.subr.mxu0 0.0
        %1438 = vmatpush1.msra.mxu0 %v1402
        %1439 = vmatprep.subr.mxu0 0.0
        %1440 = vmatpush2.msra.mxu0 0.0
        %1441 = vmatprep.subr.mxu0 0.0
        %1442 = vmatpush2.msra.mxu0 0.0
        %1443 = vmatprep.subr.mxu0 0.0
        %1444 = vmatpush2.msra.mxu0 0.0
        %1445 = vmatprep.subr.mxu0 0.0
        %1446 = vmatpush2.msra.mxu0 0.0
        %1447 = vmatprep.subr.mxu0 0.0
        %1448 = vmatpush2.msra.mxu0 0.0
        %1449 = vmatprep.subr.mxu0 0.0
        %1450 = vmatpush2.msra.mxu0 0.0
        %1451 = vmatprep.subr.mxu0 0.0
        %1452 = vmatpush2.msra.mxu0 0.0
        %1453 = vmatprep.subr.mxu0 0.0
        %1454 = vmatpush2.msra.mxu0 0.0
        %1455 = vmatprep.subr.mxu0 0.0
        %1456 = vmatpush2.msra.mxu0 0.0
        %1457 = vmatprep.subr.mxu0 0.0
        %1458 = vmatpush2.msra.mxu0 0.0
        %1459 = vmatprep.subr.mxu0 0.0
        %1460 = vmatpush2.msra.mxu0 0.0
        %1461 = vmatprep.subr.mxu0 0.0
        %1462 = vmatpush2.msra.mxu0 0.0
        %1463 = vmatprep.subr.mxu0 0.0
        %1464 = vmatpush2.msra.mxu0 0.0
        %1465 = vmatprep.subr.mxu0 0.0
        %1466 = vmatpush2.msra.mxu0 0.0
        %1467 = vmatprep.subr.mxu0 0.0
        %1468 = vmatpush2.msra.mxu0 0.0
        %1469 = vmatprep.subr.mxu0 0.0
        %1470 = vmatpush2.msra.mxu0 0.0
        %1471 = vmatprep.mubr.f32.mxu0 0.0
        %1472 = vmatmul.mubr.f32.gmra.mxu0 %v1405
        %v1473 = vpop.f32.mrf.mxu0
        %v1474 = vadd.f32 0.0, %v1473
        %v1475 = vpop.f32.mrf.mxu0
        %1476 = vdwg.mxu0
        %v1477 = vld [vmem:[#allocation13 + $0x10] sm:$0xff]
        %v1479 = vsel %vm837, %v1474, 0
        %1481 = vmatprep.subr.mxu0 0.0
        %1482 = vmatpush1.msra.mxu0 0.0
        %1483 = vmatprep.subr.mxu0 0.0
        %1484 = vmatpush1.msra.mxu0 0.0
        %1485 = vmatprep.subr.mxu0 0.0
        %1486 = vmatpush1.msra.mxu0 0.0
        %1487 = vmatprep.subr.mxu0 0.0
        %1488 = vmatpush1.msra.mxu0 0.0
        %1489 = vmatprep.subr.mxu0 0.0
        %1490 = vmatpush1.msra.mxu0 0.0
        %1491 = vmatprep.subr.mxu0 0.0
        %1492 = vmatpush1.msra.mxu0 0.0
        %1493 = vmatprep.subr.mxu0 0.0
        %1494 = vmatpush1.msra.mxu0 0.0
        %1495 = vmatprep.subr.mxu0 0.0
        %1496 = vmatpush1.msra.mxu0 0.0
        %1497 = vmatprep.subr.mxu0 0.0
        %1498 = vmatpush1.msra.mxu0 0.0
        %1499 = vmatprep.subr.mxu0 0.0
        %1500 = vmatpush1.msra.mxu0 0.0
        %1501 = vmatprep.subr.mxu0 0.0
        %1502 = vmatpush1.msra.mxu0 0.0
        %1503 = vmatprep.subr.mxu0 0.0
        %1504 = vmatpush1.msra.mxu0 0.0
        %1505 = vmatprep.subr.mxu0 0.0
        %1506 = vmatpush1.msra.mxu0 0.0
        %1507 = vmatprep.subr.mxu0 0.0
        %1508 = vmatpush1.msra.mxu0 0.0
        %1509 = vmatprep.subr.mxu0 0.0
        %1510 = vmatpush1.msra.mxu0 0.0
        %1511 = vmatprep.subr.mxu0 0.0
        %1512 = vmatpush1.msra.mxu0 %v1477
        %1513 = vmatprep.subr.mxu0 0.0
        %1514 = vmatpush2.msra.mxu0 0.0
        %1515 = vmatprep.subr.mxu0 0.0
        %1516 = vmatpush2.msra.mxu0 0.0
        %1517 = vmatprep.subr.mxu0 0.0
        %1518 = vmatpush2.msra.mxu0 0.0
        %1519 = vmatprep.subr.mxu0 0.0
        %1520 = vmatpush2.msra.mxu0 0.0
        %1521 = vmatprep.subr.mxu0 0.0
        %1522 = vmatpush2.msra.mxu0 0.0
        %1523 = vmatprep.subr.mxu0 0.0
        %1524 = vmatpush2.msra.mxu0 0.0
        %1525 = vmatprep.subr.mxu0 0.0
        %1526 = vmatpush2.msra.mxu0 0.0
        %1527 = vmatprep.subr.mxu0 0.0
        %1528 = vmatpush2.msra.mxu0 0.0
        %1529 = vmatprep.subr.mxu0 0.0
        %1530 = vmatpush2.msra.mxu0 0.0
        %1531 = vmatprep.subr.mxu0 0.0
        %1532 = vmatpush2.msra.mxu0 0.0
        %1533 = vmatprep.subr.mxu0 0.0
        %1534 = vmatpush2.msra.mxu0 0.0
        %1535 = vmatprep.subr.mxu0 0.0
        %1536 = vmatpush2.msra.mxu0 0.0
        %1537 = vmatprep.subr.mxu0 0.0
        %1538 = vmatpush2.msra.mxu0 0.0
        %1539 = vmatprep.subr.mxu0 0.0
        %1540 = vmatpush2.msra.mxu0 0.0
        %1541 = vmatprep.subr.mxu0 0.0
        %1542 = vmatpush2.msra.mxu0 0.0
        %1543 = vmatprep.subr.mxu0 0.0
        %1544 = vmatpush2.msra.mxu0 0.0
        %1545 = vmatprep.mubr.f32.mxu0 0.0
        %1546 = vmatmul.mubr.f32.gmra.mxu0 %v1479
        %v1547 = vpop.f32.mrf.mxu0
        %v1548 = vadd.f32 0.0, %v1547
        %v1549 = vpop.f32.mrf.mxu0
        %1550 = vdwg.mxu0
        %v1551 = vadd.f32 %v1309, %v1548
        %1552 = vrot.lane.b32.xlu0 %v827, 104
        %v1553 = vpop.permute.xlu0 %1552
        %1554 = vrot.lane.b32.xlu0 %v830, 104
        %v1555 = vpop.permute.xlu0 %1554
        %v1556 = vsel %vm837, %v1553, 0
        %v1558 = vsel %vm837, %v1555, 0
        %1560 = vmatprep.subr.mxu0 0.0
        %1561 = vmatpush1.xpose.msra.mxu0 0.0
        %1562 = vmatprep.subr.mxu0 0.0
        %1563 = vmatpush1.xpose.msra.mxu0 0.0
        %1564 = vmatprep.subr.mxu0 0.0
        %1565 = vmatpush1.xpose.msra.mxu0 0.0
        %1566 = vmatprep.subr.mxu0 0.0
        %1567 = vmatpush1.xpose.msra.mxu0 0.0
        %1568 = vmatprep.subr.mxu0 0.0
        %1569 = vmatpush1.xpose.msra.mxu0 0.0
        %1570 = vmatprep.subr.mxu0 0.0
        %1571 = vmatpush1.xpose.msra.mxu0 0.0
        %1572 = vmatprep.subr.mxu0 0.0
        %1573 = vmatpush1.xpose.msra.mxu0 0.0
        %1574 = vmatprep.subr.mxu0 0.0
        %1575 = vmatpush1.xpose.msra.mxu0 0.0
        %1576 = vmatprep.subr.mxu0 0.0
        %1577 = vmatpush1.xpose.msra.mxu0 0.0
        %1578 = vmatprep.subr.mxu0 0.0
        %1579 = vmatpush1.xpose.msra.mxu0 0.0
        %1580 = vmatprep.subr.mxu0 0.0
        %1581 = vmatpush1.xpose.msra.mxu0 0.0
        %1582 = vmatprep.subr.mxu0 0.0
        %1583 = vmatpush1.xpose.msra.mxu0 0.0
        %1584 = vmatprep.subr.mxu0 0.0
        %1585 = vmatpush1.xpose.msra.mxu0 0.0
        %1586 = vmatprep.subr.mxu0 0.0
        %1587 = vmatpush1.xpose.msra.mxu0 0.0
        %1588 = vmatprep.subr.mxu0 0.0
        %1589 = vmatpush1.xpose.msra.mxu0 0.0
        %1590 = vmatprep.subr.mxu0 0.0
        %1591 = vmatpush1.xpose.msra.mxu0 %v1558
        %1592 = vmatprep.subr.mxu0 0.0
        %1593 = vmatpush2.xpose.msra.mxu0 0.0
        %1594 = vmatprep.subr.mxu0 0.0
        %1595 = vmatpush2.xpose.msra.mxu0 0.0
        %1596 = vmatprep.subr.mxu0 0.0
        %1597 = vmatpush2.xpose.msra.mxu0 0.0
        %1598 = vmatprep.subr.mxu0 0.0
        %1599 = vmatpush2.xpose.msra.mxu0 0.0
        %1600 = vmatprep.subr.mxu0 0.0
        %1601 = vmatpush2.xpose.msra.mxu0 0.0
        %1602 = vmatprep.subr.mxu0 0.0
        %1603 = vmatpush2.xpose.msra.mxu0 0.0
        %1604 = vmatprep.subr.mxu0 0.0
        %1605 = vmatpush2.xpose.msra.mxu0 0.0
        %1606 = vmatprep.subr.mxu0 0.0
        %1607 = vmatpush2.xpose.msra.mxu0 0.0
        %1608 = vmatprep.subr.mxu0 0.0
        %1609 = vmatpush2.xpose.msra.mxu0 0.0
        %1610 = vmatprep.subr.mxu0 0.0
        %1611 = vmatpush2.xpose.msra.mxu0 0.0
        %1612 = vmatprep.subr.mxu0 0.0
        %1613 = vmatpush2.xpose.msra.mxu0 0.0
        %1614 = vmatprep.subr.mxu0 0.0
        %1615 = vmatpush2.xpose.msra.mxu0 0.0
        %1616 = vmatprep.subr.mxu0 0.0
        %1617 = vmatpush2.xpose.msra.mxu0 0.0
        %1618 = vmatprep.subr.mxu0 0.0
        %1619 = vmatpush2.xpose.msra.mxu0 0.0
        %1620 = vmatprep.subr.mxu0 0.0
        %1621 = vmatpush2.xpose.msra.mxu0 0.0
        %1622 = vmatprep.subr.mxu0 0.0
        %1623 = vmatpush2.xpose.msra.mxu0 0.0
        %1624 = vmatprep.mubr.f32.mxu0 0.0
        %1625 = vmatmul.mubr.f32.gmra.mxu0 %v1556
        %v1626 = vpop.f32.mrf.mxu0
        %v1627 = vadd.f32 %v836, %v1626
        %v1628 = vpop.f32.mrf.mxu0
        %1629 = vdwg.mxu0
        %v1630 = vsel %vm837, %v1627, -inf
        %1631 = vmax.xlane.f32.xlu0 %v1630
        %v1632 = vpop.xlane.xlu0 %1631
        %v1633 = vsub.f32 %v1627, %v1632
        %v1634 = vmul.f32 %v1633, 1.442695
        %v1635 = vpow.pop %v1634
        %v1636 = vsel %vm837, %v1635, 0.0
        %1637 = vadd.xlane.f32.xlu0 %v1636
        %v1638 = vpop.xlane.xlu0 %1637
        %v1639 = vrcp.pop %v1638
        %v1640 = vmul.f32 %v1635, %v1639
        %1641 = vrot.lane.b32.xlu0 %v822, 104
        %v1642 = vpop.permute.xlu0 %1641
        %v1645 = vsel %vm837, %v1640, 0
        %1647 = vmatprep.subr.mxu0 0.0
        %1648 = vmatpush1.msra.mxu0 0.0
        %1649 = vmatprep.subr.mxu0 0.0
        %1650 = vmatpush1.msra.mxu0 0.0
        %1651 = vmatprep.subr.mxu0 0.0
        %1652 = vmatpush1.msra.mxu0 0.0
        %1653 = vmatprep.subr.mxu0 0.0
        %1654 = vmatpush1.msra.mxu0 0.0
        %1655 = vmatprep.subr.mxu0 0.0
        %1656 = vmatpush1.msra.mxu0 0.0
        %1657 = vmatprep.subr.mxu0 0.0
        %1658 = vmatpush1.msra.mxu0 0.0
        %1659 = vmatprep.subr.mxu0 0.0
        %1660 = vmatpush1.msra.mxu0 0.0
        %1661 = vmatprep.subr.mxu0 0.0
        %1662 = vmatpush1.msra.mxu0 0.0
        %1663 = vmatprep.subr.mxu0 0.0
        %1664 = vmatpush1.msra.mxu0 0.0
        %1665 = vmatprep.subr.mxu0 0.0
        %1666 = vmatpush1.msra.mxu0 0.0
        %1667 = vmatprep.subr.mxu0 0.0
        %1668 = vmatpush1.msra.mxu0 0.0
        %1669 = vmatprep.subr.mxu0 0.0
        %1670 = vmatpush1.msra.mxu0 0.0
        %1671 = vmatprep.subr.mxu0 0.0
        %1672 = vmatpush1.msra.mxu0 0.0
        %1673 = vmatprep.subr.mxu0 0.0
        %1674 = vmatpush1.msra.mxu0 0.0
        %1675 = vmatprep.subr.mxu0 0.0
        %1676 = vmatpush1.msra.mxu0 0.0
        %1677 = vmatprep.subr.mxu0 0.0
        %1678 = vmatpush1.msra.mxu0 %v1642
        %1679 = vmatprep.subr.mxu0 0.0
        %1680 = vmatpush2.msra.mxu0 0.0
        %1681 = vmatprep.subr.mxu0 0.0
        %1682 = vmatpush2.msra.mxu0 0.0
        %1683 = vmatprep.subr.mxu0 0.0
        %1684 = vmatpush2.msra.mxu0 0.0
        %1685 = vmatprep.subr.mxu0 0.0
        %1686 = vmatpush2.msra.mxu0 0.0
        %1687 = vmatprep.subr.mxu0 0.0
        %1688 = vmatpush2.msra.mxu0 0.0
        %1689 = vmatprep.subr.mxu0 0.0
        %1690 = vmatpush2.msra.mxu0 0.0
        %1691 = vmatprep.subr.mxu0 0.0
        %1692 = vmatpush2.msra.mxu0 0.0
        %1693 = vmatprep.subr.mxu0 0.0
        %1694 = vmatpush2.msra.mxu0 0.0
        %1695 = vmatprep.subr.mxu0 0.0
        %1696 = vmatpush2.msra.mxu0 0.0
        %1697 = vmatprep.subr.mxu0 0.0
        %1698 = vmatpush2.msra.mxu0 0.0
        %1699 = vmatprep.subr.mxu0 0.0
        %1700 = vmatpush2.msra.mxu0 0.0
        %1701 = vmatprep.subr.mxu0 0.0
        %1702 = vmatpush2.msra.mxu0 0.0
        %1703 = vmatprep.subr.mxu0 0.0
        %1704 = vmatpush2.msra.mxu0 0.0
        %1705 = vmatprep.subr.mxu0 0.0
        %1706 = vmatpush2.msra.mxu0 0.0
        %1707 = vmatprep.subr.mxu0 0.0
        %1708 = vmatpush2.msra.mxu0 0.0
        %1709 = vmatprep.subr.mxu0 0.0
        %1710 = vmatpush2.msra.mxu0 0.0
        %1711 = vmatprep.mubr.f32.mxu0 0.0
        %1712 = vmatmul.mubr.f32.gmra.mxu0 %v1645
        %v1713 = vpop.f32.mrf.mxu0
        %v1714 = vadd.f32 0.0, %v1713
        %v1715 = vpop.f32.mrf.mxu0
        %1716 = vdwg.mxu0
        %v1717 = vld [vmem:[#allocation13 + $0x18] sm:$0xff]
        %v1719 = vsel %vm837, %v1714, 0
        %1721 = vmatprep.subr.mxu0 0.0
        %1722 = vmatpush1.msra.mxu0 0.0
        %1723 = vmatprep.subr.mxu0 0.0
        %1724 = vmatpush1.msra.mxu0 0.0
        %1725 = vmatprep.subr.mxu0 0.0
        %1726 = vmatpush1.msra.mxu0 0.0
        %1727 = vmatprep.subr.mxu0 0.0
        %1728 = vmatpush1.msra.mxu0 0.0
        %1729 = vmatprep.subr.mxu0 0.0
        %1730 = vmatpush1.msra.mxu0 0.0
        %1731 = vmatprep.subr.mxu0 0.0
        %1732 = vmatpush1.msra.mxu0 0.0
        %1733 = vmatprep.subr.mxu0 0.0
        %1734 = vmatpush1.msra.mxu0 0.0
        %1735 = vmatprep.subr.mxu0 0.0
        %1736 = vmatpush1.msra.mxu0 0.0
        %1737 = vmatprep.subr.mxu0 0.0
        %1738 = vmatpush1.msra.mxu0 0.0
        %1739 = vmatprep.subr.mxu0 0.0
        %1740 = vmatpush1.msra.mxu0 0.0
        %1741 = vmatprep.subr.mxu0 0.0
        %1742 = vmatpush1.msra.mxu0 0.0
        %1743 = vmatprep.subr.mxu0 0.0
        %1744 = vmatpush1.msra.mxu0 0.0
        %1745 = vmatprep.subr.mxu0 0.0
        %1746 = vmatpush1.msra.mxu0 0.0
        %1747 = vmatprep.subr.mxu0 0.0
        %1748 = vmatpush1.msra.mxu0 0.0
        %1749 = vmatprep.subr.mxu0 0.0
        %1750 = vmatpush1.msra.mxu0 0.0
        %1751 = vmatprep.subr.mxu0 0.0
        %1752 = vmatpush1.msra.mxu0 %v1717
        %1753 = vmatprep.subr.mxu0 0.0
        %1754 = vmatpush2.msra.mxu0 0.0
        %1755 = vmatprep.subr.mxu0 0.0
        %1756 = vmatpush2.msra.mxu0 0.0
        %1757 = vmatprep.subr.mxu0 0.0
        %1758 = vmatpush2.msra.mxu0 0.0
        %1759 = vmatprep.subr.mxu0 0.0
        %1760 = vmatpush2.msra.mxu0 0.0
        %1761 = vmatprep.subr.mxu0 0.0
        %1762 = vmatpush2.msra.mxu0 0.0
        %1763 = vmatprep.subr.mxu0 0.0
        %1764 = vmatpush2.msra.mxu0 0.0
        %1765 = vmatprep.subr.mxu0 0.0
        %1766 = vmatpush2.msra.mxu0 0.0
        %1767 = vmatprep.subr.mxu0 0.0
        %1768 = vmatpush2.msra.mxu0 0.0
        %1769 = vmatprep.subr.mxu0 0.0
        %1770 = vmatpush2.msra.mxu0 0.0
        %1771 = vmatprep.subr.mxu0 0.0
        %1772 = vmatpush2.msra.mxu0 0.0
        %1773 = vmatprep.subr.mxu0 0.0
        %1774 = vmatpush2.msra.mxu0 0.0
        %1775 = vmatprep.subr.mxu0 0.0
        %1776 = vmatpush2.msra.mxu0 0.0
        %1777 = vmatprep.subr.mxu0 0.0
        %1778 = vmatpush2.msra.mxu0 0.0
        %1779 = vmatprep.subr.mxu0 0.0
        %1780 = vmatpush2.msra.mxu0 0.0
        %1781 = vmatprep.subr.mxu0 0.0
        %1782 = vmatpush2.msra.mxu0 0.0
        %1783 = vmatprep.subr.mxu0 0.0
        %1784 = vmatpush2.msra.mxu0 0.0
        %1785 = vmatprep.mubr.f32.mxu0 0.0
        %1786 = vmatmul.mubr.f32.gmra.mxu0 %v1719
        %v1787 = vpop.f32.mrf.mxu0
        %v1788 = vadd.f32 0.0, %v1787
        %v1789 = vpop.f32.mrf.mxu0
        %1790 = vdwg.mxu0
        %v1791 = vadd.f32 %v1551, %v1788
        %1792 = vst [vmem:[%s447] sm:$0xff] %v1791
        %s1793 = sand.u32 %s232, 1
        %s1794 = scalar_lea.sflag [#allocation4], %s1793
        %s1795 = sand.u32 %s232, 1
        %s1796 = smul.addr %s1795, 8
        %s1797 = scalar_lea.vmem [#allocation16], %s1796
        // Predicated region
        $region89: #{tpu_custom_call.1} parent=55 // pred_check
          %p1798 = pneg %p242
        $region90: #{tpu_custom_call.1} parent=55 // pred_check_branch
          %1800 = sbr.rel (%p1798) target = $region92
        $region91: #{tpu_custom_call.1} parent=55 // pred_region
          %s1802 = ssub.s32 128, 128
          %1803 = vsyncadd %s1794, %s1802
          %s1804 = smul.addr %s30, 128
          %s1805 = scalar_lea.hbm %s9, %s1804
          %s1807 = sshll.u32 %s1797, 4
          %s1808 = int_to_ptr.vmem [resolvable:$true] %s1807
          %1810 = dma.vmem_to_hbm [thread:$0]  %s1808, 128, %s1805, %s1794
        $region92: #{tpu_custom_call.1} parent=55 // pred_fallthru
          _
      $region56: #{tpu_custom_call.1} parent=5 // pred_fallthru
        _
      %p1811 = scmp.le.s32.totalorder 2, %s25
      // Predicated region
      $region93: #{tpu_custom_call.1} parent=5 // pred_check
        %p1812 = pneg %p1811
      $region94: #{tpu_custom_call.1} parent=5 // pred_check_branch
        %1814 = sbr.rel (%p1812) target = $region96
      $region95: #{tpu_custom_call.1} parent=5 // pred_region
        %s1815 = ssub.s32 %s25, 2
        // Predicated region
        $region97: #{tpu_custom_call.1} parent=95 // pred_check
          %p1816 = pneg %p248
        $region98: #{tpu_custom_call.1} parent=95 // pred_check_branch
          %1818 = sbr.rel (%p1816) target = $region100
        $region99: #{tpu_custom_call.1} parent=95 // pred_region
          %s1819 = sand.u32 %s233, 1
          %s1820 = scalar_lea.sflag [#allocation4], %s1819
          %s1821 = sand.u32 %s233, 1
          %s1822 = smul.addr %s1821, 8
          %s1823 = scalar_lea.vmem [#allocation16], %s1822
          %1824 = dma.done %s1820, 128
        $region100: #{tpu_custom_call.1} parent=95 // pred_fallthru
          _
      $region96: #{tpu_custom_call.1} parent=5 // pred_fallthru
        _
    $region6: #{tpu_custom_call.1} parent=1 // loop_footer
      %s29 = sadd.s32 1, %s25
    $region7: #{tpu_custom_call.1} parent=1 // loop_footer_branch
      %24 = sbr.rel target = $region3
    $region8: #{tpu_custom_call.1} parent=1 // loop_exit
      _
    %1825 = vsyncpa [#allocation3], 1
    %s1826 = scalar_lea.sflag [#allocation3], 1
    %1827 = vsyncpa %s1826, 1
    %1828 = vsyncpa [#allocation6], 1
    %1829 = vsyncpa [#allocation9], 1
    %1830 = vsyncpa [#allocation12], 1
    %1831 = vsyncpa [#allocation15], 1
    %1832 = vsyncpa [#allocation4], 1
    %s1833 = scalar_lea.sflag [#allocation4], 1
    %1834 = vsyncpa %s1833, 1

</llo_original>
